<compile_context>
chip_gen: v5e
topology: v5e:2x2
jax: 0.10.0
libtpu: 0.0.40
codegen_flags: <defaults>
</compile_context>

<pallas_src>
import functools

import jax
import jax.numpy as jnp
from jax import lax
from jax.experimental import pallas as pl
from jax.experimental.pallas import tpu as pltpu


# A(M,K) x B(N,K) -> (M,N): contract last dims, no materialized transpose.
_CONTRACT_LAST = (((1,), (1,)), ((), ()))
_VMEM_LIMIT = 48 * 1024 * 1024   # raise scoped VMEM (v5e default 16 MiB, v6e/v7x 32 MiB)


def _nbytes(*arrays):
    return int(sum(int(a.size) * a.dtype.itemsize for a in arrays))


# ----------------------------------------------------------------------------
# Fused MHA core: per-head (weight-sliced) projections -> softmax -> AV ->
# accumulated out-projection -> +residual -> LayerNorm.  One batch element.
# ----------------------------------------------------------------------------
def _mha_core(q, k, v, x_res,
              wq_ref, bq_ref, wk_ref, bk_ref, wv_ref, bv_ref,
              wo_ref, bo_ref, g_ref, bl_ref,
              *, num_heads, eps, need_weights):
    """q:(Lq,D) k:(Lk,D) v:(Lk,D) x_res:(Lq,D) f32.

    Per-head weights are pre-reshaped in the wrapper:
      wq/wk/wv : (H, Dh, D) bf16   (1/sqrt(Dh) folded into wq)
      bq/bk/bv : (H, 1, Dh) f32    (1/sqrt(Dh) folded into bq)
      wo       : (H, Dh, D) bf16   (out_proj_weight.T head slabs)
    The head loop accumulates the out-projection, so no (Lq, H*Dh) concat and no
    sub-128-lane activation slicing is ever materialized.
    """
    Lq, D = q.shape
    Lk = k.shape[0]

    q_bf = q.astype(jnp.bfloat16)
    k_bf = k.astype(jnp.bfloat16)
    v_bf = v.astype(jnp.bfloat16)

    def head_body(h, carry):
        out_acc = carry[0]
        qh = lax.dot_general(q_bf, wq_ref[h], _CONTRACT_LAST,
                             preferred_element_type=jnp.float32) + bq_ref[h]
        kh = lax.dot_general(k_bf, wk_ref[h], _CONTRACT_LAST,
                             preferred_element_type=jnp.float32) + bk_ref[h]
        vh = lax.dot_general(v_bf, wv_ref[h], _CONTRACT_LAST,
                             preferred_element_type=jnp.float32) + bv_ref[h]
        # Scores; 1/sqrt(Dh) already folded into wq/bq.
        s = lax.dot_general(qh.astype(jnp.bfloat16), kh.astype(jnp.bfloat16),
                            _CONTRACT_LAST, preferred_element_type=jnp.float32)
        m = jnp.max(s, axis=-1, keepdims=True)
        e = jnp.exp(s - m)
        p = e * pl.reciprocal(jnp.sum(e, axis=-1, keepdims=True), approx=True)
        oh = jnp.dot(p.astype(jnp.bfloat16), vh.astype(jnp.bfloat16),
                     preferred_element_type=jnp.float32)                 # (Lq, Dh)
        out_acc = out_acc + jnp.dot(oh.astype(jnp.bfloat16), wo_ref[h],
                                    preferred_element_type=jnp.float32)  # (Lq, D)
        if need_weights:
            return (out_acc, carry[1] + p)
        return (out_acc,)

    init = (jnp.zeros((Lq, D), jnp.float32),)
    if need_weights:
        init = init + (jnp.zeros((Lq, Lk), jnp.float32),)
    carry = lax.fori_loop(0, num_heads, head_body, init)

    out = carry[0] + bo_ref[...]
    z = x_res + out
    mean = jnp.mean(z, axis=-1, keepdims=True)
    var = jnp.mean((z - mean) ** 2, axis=-1, keepdims=True)
    normed = (z - mean) * lax.rsqrt(var + eps) * g_ref[...] + bl_ref[...]

    w_mean = carry[1] * (1.0 / num_heads) if need_weights else None
    return normed, w_mean


def _self_attn_ln_kernel(x_ref, pos_ref, sem_ref,
                         wq_ref, bq_ref, wk_ref, bk_ref, wv_ref, bv_ref,
                         wo_ref, bo_ref, g_ref, bl_ref,
                         o_ref, w_ref, *, num_heads, eps):
    x = x_ref[0]                                               # (Lq, D) f32
    q = x + pos_ref[0].astype(jnp.float32) + sem_ref[0].astype(jnp.float32)
    normed, w_mean = _mha_core(
        q, q, x, x,
        wq_ref, bq_ref, wk_ref, bk_ref, wv_ref, bv_ref,
        wo_ref, bo_ref, g_ref, bl_ref,
        num_heads=num_heads, eps=eps, need_weights=True)
    o_ref[0] = normed
    w_ref[0] = w_mean


def _cross_attn_ln_kernel(x_ref, pos_ref, mem_ref, mpos_ref,
                          wq_ref, bq_ref, wk_ref, bk_ref, wv_ref, bv_ref,
                          wo_ref, bo_ref, g_ref, bl_ref,
                          o_ref, *, num_heads, eps):
    x = x_ref[0]                                               # (Lq, D) f32
    q = x + pos_ref[0].astype(jnp.float32)
    mem = mem_ref[0].astype(jnp.float32)                       # bf16 DMA -> f32
    k = mem + mpos_ref[0].astype(jnp.float32)
    normed, _ = _mha_core(
        q, k, mem, x,
        wq_ref, bq_ref, wk_ref, bk_ref, wv_ref, bv_ref,
        wo_ref, bo_ref, g_ref, bl_ref,
        num_heads=num_heads, eps=eps, need_weights=False)
    o_ref[0] = normed


# ----------------------------------------------------------------------------
# Wrappers for the attention blocks.
# ----------------------------------------------------------------------------
def _prep_attn_params(p, num_heads):
    """Pre-reshape MHA weights to per-head slabs; fold 1/sqrt(Dh) into Q."""
    D = p["out_proj_weight"].shape[0]
    Dh = D // num_heads
    scale = float(Dh) ** -0.5
    w_in = p["in_proj_weight"].astype(jnp.float32)             # (3D, D)
    b_in = p["in_proj_bias"].astype(jnp.float32)               # (3D,)
    wq = (w_in[:D] * scale).reshape(num_heads, Dh, D).astype(jnp.bfloat16)
    wk = w_in[D:2 * D].reshape(num_heads, Dh, D).astype(jnp.bfloat16)
    wv = w_in[2 * D:].reshape(num_heads, Dh, D).astype(jnp.bfloat16)
    bq = (b_in[:D] * scale).reshape(num_heads, 1, Dh)
    bk = b_in[D:2 * D].reshape(num_heads, 1, Dh)
    bv = b_in[2 * D:].reshape(num_heads, 1, Dh)
    # out = attn @ W_out.T  ==  sum_h o_h @ (W_out.T)[h*Dh:(h+1)*Dh, :]
    wo = (p["out_proj_weight"].astype(jnp.float32).T
          .reshape(num_heads, Dh, D).astype(jnp.bfloat16))
    bo = p["out_proj_bias"].reshape(1, D).astype(jnp.float32)
    return (wq, bq, wk, bk, wv, bv, wo, bo)


def _weight_specs(H, Dh, D):
    z3 = lambda *a: (0, 0, 0)
    z2 = lambda *a: (0, 0)
    return [
        pl.BlockSpec((H, Dh, D), z3),   # wq
        pl.BlockSpec((H, 1, Dh), z3),   # bq
        pl.BlockSpec((H, Dh, D), z3),   # wk
        pl.BlockSpec((H, 1, Dh), z3),   # bk
        pl.BlockSpec((H, Dh, D), z3),   # wv
        pl.BlockSpec((H, 1, Dh), z3),   # bv
        pl.BlockSpec((H, Dh, D), z3),   # wo
        pl.BlockSpec((1, D), z2),       # bo
        pl.BlockSpec((1, D), z2),       # gamma
        pl.BlockSpec((1, D), z2),       # beta
    ]


def fused_self_attn_add_ln(x, pos_bf, sem_bf, attn_p, gamma, beta, num_heads, eps=1e-5):
    """LayerNorm(x + SelfMHA(x+pos+sem, x+pos+sem, x)); returns head-mean weights."""
    B, Lq, D = x.shape
    Dh = D // num_heads
    g = gamma.reshape(1, D).astype(jnp.float32)
    bl = beta.reshape(1, D).astype(jnp.float32)
    args = (x, pos_bf, sem_bf) + attn_p + (g, bl)

    act_specs = [
        pl.BlockSpec((1, Lq, D), lambda b: (b, 0, 0)),   # x (f32)
        pl.BlockSpec((1, Lq, D), lambda b: (b, 0, 0)),   # pos (bf16)
        pl.BlockSpec((1, Lq, D), lambda b: (b, 0, 0)),   # sem (bf16)
    ]
    cost = pl.CostEstimate(
        flops=2 * B * (4 * Lq * D * D + 2 * Lq * Lq * D),
        transcendentals=B * num_heads * Lq * Lq,
        bytes_accessed=_nbytes(*args) + B * Lq * D * 4 + B * Lq * Lq * 4)

    out, w = pl.pallas_call(
        functools.partial(_self_attn_ln_kernel, num_heads=num_heads, eps=eps),
        grid=(B,),
        out_shape=(jax.ShapeDtypeStruct((B, Lq, D), jnp.float32),
                   jax.ShapeDtypeStruct((B, Lq, Lq), jnp.float32)),
        in_specs=act_specs + _weight_specs(num_heads, Dh, D),
        out_specs=(pl.BlockSpec((1, Lq, D), lambda b: (b, 0, 0)),
                   pl.BlockSpec((1, Lq, Lq), lambda b: (b, 0, 0))),
        compiler_params=pltpu.CompilerParams(
            dimension_semantics=("parallel",), vmem_limit_bytes=_VMEM_LIMIT),
        cost_estimate=cost,
    )(*args)
    return out, w


def fused_cross_attn_add_ln(x, pos_bf, mem_bf, mpos_bf, attn_p, gamma, beta,
                            num_heads, eps=1e-5):
    """LayerNorm(x + MHA(x+pos, memory+memory_pos, memory)) — no weights output."""
    B, Lq, D = x.shape
    Lk = mem_bf.shape[1]
    Dh = D // num_heads
    g = gamma.reshape(1, D).astype(jnp.float32)
    bl = beta.reshape(1, D).astype(jnp.float32)
    args = (x, pos_bf, mem_bf, mpos_bf) + attn_p + (g, bl)

    act_specs = [
        pl.BlockSpec((1, Lq, D), lambda b: (b, 0, 0)),   # x (f32)
        pl.BlockSpec((1, Lq, D), lambda b: (b, 0, 0)),   # pos (bf16)
        pl.BlockSpec((1, Lk, D), lambda b: (b, 0, 0)),   # memory (bf16)
        pl.BlockSpec((1, Lk, D), lambda b: (b, 0, 0)),   # memory_pos (bf16)
    ]
    cost = pl.CostEstimate(
        flops=2 * B * (2 * Lq * D * D + 2 * Lk * D * D + 2 * Lq * Lk * D),
        transcendentals=B * num_heads * Lq * Lk,
        bytes_accessed=_nbytes(*args) + B * Lq * D * 4)

    out = pl.pallas_call(
        functools.partial(_cross_attn_ln_kernel, num_heads=num_heads, eps=eps),
        grid=(B,),
        out_shape=jax.ShapeDtypeStruct((B, Lq, D), jnp.float32),
        in_specs=act_specs + _weight_specs(num_heads, Dh, D),
        out_specs=pl.BlockSpec((1, Lq, D), lambda b: (b, 0, 0)),
        compiler_params=pltpu.CompilerParams(
            dimension_semantics=("parallel",), vmem_limit_bytes=_VMEM_LIMIT),
        cost_estimate=cost,
    )(*args)
    return out


# ----------------------------------------------------------------------------
# Fused FFN + residual + LayerNorm (M-tiled, optional Dff-chunk reduction axis).
# ----------------------------------------------------------------------------
def _ffn_ln_kernel(x_ref, w1_ref, b1_ref, w2_ref, b2_ref, g_ref, bl_ref,
                   o_ref, acc_ref, *, eps, n_chunks):
    kc = pl.program_id(1)

    @pl.when(kc == 0)
    def _init():
        acc_ref[...] = jnp.zeros_like(acc_ref)

    x_bf = x_ref[...].astype(jnp.bfloat16)                      # (bm, D)
    h = lax.dot_general(x_bf, w1_ref[...], _CONTRACT_LAST,
                        preferred_element_type=jnp.float32) + b1_ref[...]
    h = jnp.maximum(h, 0.0)
    acc_ref[...] += lax.dot_general(h.astype(jnp.bfloat16), w2_ref[...],
                                    _CONTRACT_LAST, preferred_element_type=jnp.float32)

    @pl.when(kc == n_chunks - 1)
    def _finalize():
        z = x_ref[...] + acc_ref[...] + b2_ref[...]
        mean = jnp.mean(z, axis=-1, keepdims=True)
        var = jnp.mean((z - mean) ** 2, axis=-1, keepdims=True)
        o_ref[...] = (z - mean) * lax.rsqrt(var + eps) * g_ref[...] + bl_ref[...]


def _row_tile(M):
    for t in (512, 256, 128):
        if M >= t:
            return t
    return ((M + 7) // 8) * 8


def _ffn_dff_chunk(D, Dff, budget_bytes=8 * 1024 * 1024):
    """Largest Dff chunk keeping resident bf16 w1+w2 tiles under the budget."""
    if 2 * D * Dff * 2 <= budget_bytes:
        return Dff
    for dk in (2048, 1024, 512, 256, 128):
        if Dff % dk == 0 and 2 * D * dk * 2 <= budget_bytes:
            return dk
    return Dff


def fused_ffn_add_ln(x, w1, b1, w2, b2, gamma, beta, eps=1e-5):
    """LayerNorm(x + linear2(relu(linear1(x)))) in one pallas_call."""
    B, L, D = x.shape
    Dff = w1.shape[0]
    M = B * L
    bm = _row_tile(M)
    Mp = pl.cdiv(M, bm) * bm
    xm = x.reshape(M, D)
    if Mp != M:
        xm = jnp.pad(xm, ((0, Mp - M), (0, 0)))   # padded rows are sliced off below

    dk = _ffn_dff_chunk(D, Dff)
    nk = Dff // dk

    w1b = w1.astype(jnp.bfloat16)
    w2b = w2.astype(jnp.bfloat16)
    b1r = b1.reshape(1, Dff).astype(jnp.float32)
    b2r = b2.reshape(1, D).astype(jnp.float32)
    g = gamma.reshape(1, D).astype(jnp.float32)
    bl = beta.reshape(1, D).astype(jnp.float32)

    cost = pl.CostEstimate(
        flops=4 * Mp * D * Dff, transcendentals=0,
        bytes_accessed=_nbytes(xm, w1b, b1r, w2b, b2r, g, bl) + Mp * D * 4)

    out = pl.pallas_call(
        functools.partial(_ffn_ln_kernel, eps=eps, n_chunks=nk),
        grid=(Mp // bm, nk),
        out_shape=jax.ShapeDtypeStruct((Mp, D), jnp.float32),
        in_specs=[
            pl.BlockSpec((bm, D), lambda i, k: (i, 0)),
            pl.BlockSpec((dk, D), lambda i, k: (k, 0)),
            pl.BlockSpec((1, dk), lambda i, k: (0, k)),
            pl.BlockSpec((D, dk), lambda i, k: (0, k)),
            pl.BlockSpec((1, D), lambda i, k: (0, 0)),
            pl.BlockSpec((1, D), lambda i, k: (0, 0)),
            pl.BlockSpec((1, D), lambda i, k: (0, 0)),
        ],
        out_specs=pl.BlockSpec((bm, D), lambda i, k: (i, 0)),
        scratch_shapes=[pltpu.VMEM((bm, D), jnp.float32)],
        compiler_params=pltpu.CompilerParams(
            dimension_semantics=("parallel", "arbitrary"),
            vmem_limit_bytes=_VMEM_LIMIT),
        cost_estimate=cost,
    )(xm, w1b, b1r, w2b, b2r, g, bl)
    return out[:M].reshape(B, L, D)


# ----------------------------------------------------------------------------
# Decoder layer (forward_post path, normalize_before=False, dropout = identity)
# ----------------------------------------------------------------------------
def with_pos_embed(t, pos):   # kept for API parity (adds are fused in-kernel)
    return t if pos is None else t + pos


def with_sem_embed(t, sem):
    return t if sem is None else t + sem


def transformer_decoder_layer(x, memory, params, num_heads,
                              mask=None, pos=None, memory_pos=None, sem=None):
    # TODO(synk): key_padding_mask is not implemented; example passes mask=None.
    del mask
    B, L, D = x.shape
    S = memory.shape[1]

    pos_bf = (jnp.zeros((B, L, D), jnp.bfloat16) if pos is None
              else pos.astype(jnp.bfloat16))
    sem_bf = (jnp.zeros((B, L, D), jnp.bfloat16) if sem is None
              else sem.astype(jnp.bfloat16))
    mpos_bf = (jnp.zeros((B, S, D), jnp.bfloat16) if memory_pos is None
               else memory_pos.astype(jnp.bfloat16))

    sa = _prep_attn_params(params["self_attn"], num_heads)
    ca = _prep_attn_params(params["multi_attn"], num_heads)

    # Self-attention block (head-averaged weights returned, like PyTorch).
    x, attn_weights = fused_self_attn_add_ln(
        x, pos_bf, sem_bf, sa, params["norm1_g"], params["norm1_b"], num_heads)

    # Cross-attention block (weights dead -> not computed / not written).
    x = fused_cross_attn_add_ln(
        x, pos_bf, memory.astype(jnp.bfloat16), mpos_bf, ca,
        params["norm2_g"], params["norm2_b"], num_heads)

    # FFN block.
    x = fused_ffn_add_ln(x, params["linear1_w"], params["linear1_b"],
                         params["linear2_w"], params["linear2_b"],
                         params["norm3_g"], params["norm3_b"])
    return x, attn_weights


# ----------------------------------------------------------------------------
# Pure-JAX reference (for correctness check)
# ----------------------------------------------------------------------------
def _ref_mha(q, k, v, p, num_heads):
    B, Lq, D = q.shape
    Lk = k.shape[1]
    Dh = D // num_heads
    wq, wk, wv = jnp.split(p["in_proj_weight"], 3, axis=0)
    bq, bk, bv = jnp.split(p["in_proj_bias"], 3, axis=0)
    qp = (q @ wq.T + bq).reshape(B, Lq, num_heads, Dh).transpose(0, 2, 1, 3)
    kp = (k @ wk.T + bk).reshape(B, Lk, num_heads, Dh).transpose(0, 2, 1, 3)
    vp = (v @ wv.T + bv).reshape(B, Lk, num_heads, Dh).transpose(0, 2, 1, 3)
    s = jnp.einsum("bhqd,bhkd->bhqk", qp, kp) / (Dh ** 0.5)
    w = jax.nn.softmax(s, axis=-1)
    o = jnp.einsum("bhqk,bhkd->bhqd", w, vp).transpose(0, 2, 1, 3).reshape(B, Lq, D)
    o = o @ p["out_proj_weight"].T + p["out_proj_bias"]
    return o, jnp.mean(w, axis=1)


def _ref_ln(z, g, b, eps=1e-5):
    m = jnp.mean(z, axis=-1, keepdims=True)
    v = jnp.mean((z - m) ** 2, axis=-1, keepdims=True)
    return (z - m) * jax.lax.rsqrt(v + eps) * g + b


def _ref_forward(x, memory, params, num_heads, pos, memory_pos, sem):
    q = x + pos + sem
    x2, aw = _ref_mha(q, q, x, params["self_attn"], num_heads)
    x = _ref_ln(x + x2, params["norm1_g"], params["norm1_b"])
    x2, _ = _ref_mha(x + pos, memory + memory_pos, memory, params["multi_attn"], num_heads)
    x = _ref_ln(x + x2, params["norm2_g"], params["norm2_b"])
    h = jnp.maximum(x @ params["linear1_w"].T + params["linear1_b"], 0.0)
    x2 = h @ params["linear2_w"].T + params["linear2_b"]
    x = _ref_ln(x + x2, params["norm3_g"], params["norm3_b"])
    return x, aw


# ----------------------------------------------------------------------------
# Deterministic parameter init
# ----------------------------------------------------------------------------
def init_params(key, D, Dff):
    ks = jax.random.split(key, 20)
    s = 0.05

    def attn_params(k4):
        k0, k1, k2, k3 = jax.random.split(k4, 4)
        return {
            "in_proj_weight": jax.random.normal(k0, (3 * D, D), jnp.float32) * s,
            "in_proj_bias": jax.random.normal(k1, (3 * D,), jnp.float32) * s,
            "out_proj_weight": jax.random.normal(k2, (D, D), jnp.float32) * s,
            "out_proj_bias": jax.random.normal(k3, (D,), jnp.float32) * s,
        }

    return {
        "self_attn": attn_params(ks[0]),
        "multi_attn": attn_params(ks[1]),
        "linear1_w": jax.random.normal(ks[2], (Dff, D), jnp.float32) * s,
        "linear1_b": jax.random.normal(ks[3], (Dff,), jnp.float32) * s,
        "linear2_w": jax.random.normal(ks[4], (D, Dff), jnp.float32) * s,
        "linear2_b": jax.random.normal(ks[5], (D,), jnp.float32) * s,
        "norm1_g": 1.0 + 0.01 * jax.random.normal(ks[6], (D,), jnp.float32),
        "norm1_b": 0.01 * jax.random.normal(ks[7], (D,), jnp.float32),
        "norm2_g": 1.0 + 0.01 * jax.random.normal(ks[8], (D,), jnp.float32),
        "norm2_b": 0.01 * jax.random.normal(ks[9], (D,), jnp.float32),
        "norm3_g": 1.0 + 0.01 * jax.random.normal(ks[10], (D,), jnp.float32),
        "norm3_b": 0.01 * jax.random.normal(ks[11], (D,), jnp.float32),
    }


# ----------------------------------------------------------------------------
if __name__ == "__main__":
    B, L, S, D, H, Dff = 2, 8, 16, 32, 4, 64  # batch, tgt-seq, mem-seq, model, heads, ffn

    key = jax.random.PRNGKey(0)
    k_in = jax.random.split(key, 6)
    x = jax.random.normal(k_in[0], (B, L, D), jnp.float32)
    memory = jax.random.normal(k_in[1], (B, S, D), jnp.float32)
    pos = jax.random.normal(k_in[2], (B, L, D), jnp.float32) * 0.1
    memory_pos = jax.random.normal(k_in[3], (B, S, D), jnp.float32) * 0.1
    sem = jax.random.normal(k_in[4], (B, L, D), jnp.float32) * 0.1
    params = init_params(k_in[5], D, Dff)

    out, attn_w = transformer_decoder_layer(
        x, memory, params, H, mask=None, pos=pos, memory_pos=memory_pos, sem=sem
    )
    out = jax.block_until_ready(out)
    attn_w = jax.block_until_ready(attn_w)

    ref_out, ref_w = _ref_forward(x, memory, params, H, pos, memory_pos, sem)
    assert out.shape == (B, L, D) and attn_w.shape == (B, L, L)
    assert jnp.allclose(out, ref_out, rtol=1e-2, atol=1e-2), \
        float(jnp.max(jnp.abs(out - ref_out)))
    assert jnp.allclose(attn_w, ref_w, rtol=1e-2, atol=1e-2), \
        float(jnp.max(jnp.abs(attn_w - ref_w)))

    print("KERNEL_OK")
</pallas_src>

<mosaic_0001>
module attributes {stable_mosaic.version = 11 : i64} {
  func.func @_self_attn_ln_kernel(%arg0: i32, %arg1: memref<1x8x32xf32, #tpu.memory_space<vmem>>, %arg2: memref<1x8x32xbf16, #tpu.memory_space<vmem>>, %arg3: memref<1x8x32xbf16, #tpu.memory_space<vmem>>, %arg4: memref<4x8x32xbf16, #tpu.memory_space<vmem>>, %arg5: memref<4x1x8xf32, #tpu.memory_space<vmem>>, %arg6: memref<4x8x32xbf16, #tpu.memory_space<vmem>>, %arg7: memref<4x1x8xf32, #tpu.memory_space<vmem>>, %arg8: memref<4x8x32xbf16, #tpu.memory_space<vmem>>, %arg9: memref<4x1x8xf32, #tpu.memory_space<vmem>>, %arg10: memref<4x8x32xbf16, #tpu.memory_space<vmem>>, %arg11: memref<1x32xf32, #tpu.memory_space<vmem>>, %arg12: memref<1x32xf32, #tpu.memory_space<vmem>>, %arg13: memref<1x32xf32, #tpu.memory_space<vmem>>, %arg14: memref<1x8x32xf32, #tpu.memory_space<vmem>>, %arg15: memref<1x8x8xf32, #tpu.memory_space<vmem>>) attributes {dimension_semantics = [#tpu.dimension_semantics<parallel>], iteration_bounds = array<i64: 2>, scalar_prefetch = 0 : i64, scratch_operands = 0 : i64, tpu.core_type = #tpu.core_type<tc>, window_params = [{transform_indices = @transform_0, window_bounds = array<i64: 1, 8, 32>}, {transform_indices = @transform_1, window_bounds = array<i64: 1, 8, 32>}, {transform_indices = @transform_2, window_bounds = array<i64: 1, 8, 32>}, {pipeline_mode = #tpu.pipeline_mode<synchronous>, transform_indices = @transform_3, window_bounds = array<i64: 4, 8, 32>}, {pipeline_mode = #tpu.pipeline_mode<synchronous>, transform_indices = @transform_4, window_bounds = array<i64: 4, 1, 8>}, {pipeline_mode = #tpu.pipeline_mode<synchronous>, transform_indices = @transform_5, window_bounds = array<i64: 4, 8, 32>}, {pipeline_mode = #tpu.pipeline_mode<synchronous>, transform_indices = @transform_6, window_bounds = array<i64: 4, 1, 8>}, {pipeline_mode = #tpu.pipeline_mode<synchronous>, transform_indices = @transform_7, window_bounds = array<i64: 4, 8, 32>}, {pipeline_mode = #tpu.pipeline_mode<synchronous>, transform_indices = @transform_8, window_bounds = array<i64: 4, 1, 8>}, {pipeline_mode = #tpu.pipeline_mode<synchronous>, transform_indices = @transform_9, window_bounds = array<i64: 4, 8, 32>}, {pipeline_mode = #tpu.pipeline_mode<synchronous>, transform_indices = @transform_10, window_bounds = array<i64: 1, 32>}, {pipeline_mode = #tpu.pipeline_mode<synchronous>, transform_indices = @transform_11, window_bounds = array<i64: 1, 32>}, {pipeline_mode = #tpu.pipeline_mode<synchronous>, transform_indices = @transform_12, window_bounds = array<i64: 1, 32>}, {transform_indices = @transform_13, window_bounds = array<i64: 1, 8, 32>}, {transform_indices = @transform_14, window_bounds = array<i64: 1, 8, 8>}]} {
    %c0 = arith.constant 0 : index
    %c0_0 = arith.constant 0 : index
    %c0_1 = arith.constant 0 : index
    %0 = vector.load %arg1[%c0, %c0_0, %c0_1] : memref<1x8x32xf32, #tpu.memory_space<vmem>>, vector<1x8x32xf32>
    %1 = vector.shape_cast %0 : vector<1x8x32xf32> to vector<8x32xf32>
    %c0_2 = arith.constant 0 : index
    %c0_3 = arith.constant 0 : index
    %c0_4 = arith.constant 0 : index
    %2 = vector.load %arg2[%c0_2, %c0_3, %c0_4] : memref<1x8x32xbf16, #tpu.memory_space<vmem>>, vector<1x8x32xbf16>
    %3 = vector.shape_cast %2 : vector<1x8x32xbf16> to vector<8x32xbf16>
    %4 = arith.extf %3 : vector<8x32xbf16> to vector<8x32xf32>
    %5 = arith.addf %1, %4 : vector<8x32xf32>
    %c0_5 = arith.constant 0 : index
    %c0_6 = arith.constant 0 : index
    %c0_7 = arith.constant 0 : index
    %6 = vector.load %arg3[%c0_5, %c0_6, %c0_7] : memref<1x8x32xbf16, #tpu.memory_space<vmem>>, vector<1x8x32xbf16>
    %7 = vector.shape_cast %6 : vector<1x8x32xbf16> to vector<8x32xbf16>
    %8 = arith.extf %7 : vector<8x32xbf16> to vector<8x32xf32>
    %9 = arith.addf %5, %8 : vector<8x32xf32>
    %10 = arith.truncf %9 : vector<8x32xf32> to vector<8x32xbf16>
    %11 = arith.truncf %9 : vector<8x32xf32> to vector<8x32xbf16>
    %12 = arith.truncf %1 : vector<8x32xf32> to vector<8x32xbf16>
    %cst = arith.constant 0.000000e+00 : f32
    %13 = vector.broadcast %cst : f32 to vector<8x32xf32>
    %cst_8 = arith.constant 0.000000e+00 : f32
    %14 = vector.broadcast %cst_8 : f32 to vector<8x8xf32>
    %c0_i32 = arith.constant 0 : i32
    %c4_i32 = arith.constant 4 : i32
    %15 = arith.addi %c0_i32, %c4_i32 : i32
    %c1_i32 = arith.constant 1 : i32
    %16:2 = scf.for %arg16 = %c0_i32 to %15 step %c1_i32 iter_args(%arg17 = %13, %arg18 = %14) -> (vector<8x32xf32>, vector<8x8xf32>)  : i32 {
      %53 = arith.index_cast %arg16 : i32 to index
      %c0_28 = arith.constant 0 : index
      %c0_29 = arith.constant 0 : index
      %54 = vector.load %arg4[%53, %c0_28, %c0_29] : memref<4x8x32xbf16, #tpu.memory_space<vmem>>, vector<1x8x32xbf16>
      %55 = vector.shape_cast %54 : vector<1x8x32xbf16> to vector<8x32xbf16>
      %cst_30 = arith.constant dense<0.000000e+00> : vector<8x8xf32>
      %56 = tpu.matmul %10, %55, %cst_30 {dimension_numbers = #tpu.dot_dimension_numbers<[1], [1], [0], [0], [0, 0, 1, 0], [], []>} : vector<8x32xbf16>, vector<8x32xbf16>, vector<8x8xf32> -> vector<8x8xf32>
      %57 = arith.index_cast %arg16 : i32 to index
      %c0_31 = arith.constant 0 : index
      %c0_32 = arith.constant 0 : index
      %58 = vector.load %arg5[%57, %c0_31, %c0_32] : memref<4x1x8xf32, #tpu.memory_space<vmem>>, vector<1x1x8xf32>
      %59 = vector.shape_cast %58 : vector<1x1x8xf32> to vector<1x8xf32>
      %60 = vector.broadcast %59 : vector<1x8xf32> to vector<8x8xf32>
      %61 = arith.addf %56, %60 : vector<8x8xf32>
      %62 = arith.index_cast %arg16 : i32 to index
      %c0_33 = arith.constant 0 : index
      %c0_34 = arith.constant 0 : index
      %63 = vector.load %arg6[%62, %c0_33, %c0_34] : memref<4x8x32xbf16, #tpu.memory_space<vmem>>, vector<1x8x32xbf16>
      %64 = vector.shape_cast %63 : vector<1x8x32xbf16> to vector<8x32xbf16>
      %cst_35 = arith.constant dense<0.000000e+00> : vector<8x8xf32>
      %65 = tpu.matmul %11, %64, %cst_35 {dimension_numbers = #tpu.dot_dimension_numbers<[1], [1], [0], [0], [0, 0, 1, 0], [], []>} : vector<8x32xbf16>, vector<8x32xbf16>, vector<8x8xf32> -> vector<8x8xf32>
      %66 = arith.index_cast %arg16 : i32 to index
      %c0_36 = arith.constant 0 : index
      %c0_37 = arith.constant 0 : index
      %67 = vector.load %arg7[%66, %c0_36, %c0_37] : memref<4x1x8xf32, #tpu.memory_space<vmem>>, vector<1x1x8xf32>
      %68 = vector.shape_cast %67 : vector<1x1x8xf32> to vector<1x8xf32>
      %69 = vector.broadcast %68 : vector<1x8xf32> to vector<8x8xf32>
      %70 = arith.addf %65, %69 : vector<8x8xf32>
      %71 = arith.index_cast %arg16 : i32 to index
      %c0_38 = arith.constant 0 : index
      %c0_39 = arith.constant 0 : index
      %72 = vector.load %arg8[%71, %c0_38, %c0_39] : memref<4x8x32xbf16, #tpu.memory_space<vmem>>, vector<1x8x32xbf16>
      %73 = vector.shape_cast %72 : vector<1x8x32xbf16> to vector<8x32xbf16>
      %cst_40 = arith.constant dense<0.000000e+00> : vector<8x8xf32>
      %74 = tpu.matmul %12, %73, %cst_40 {dimension_numbers = #tpu.dot_dimension_numbers<[1], [1], [0], [0], [0, 0, 1, 0], [], []>} : vector<8x32xbf16>, vector<8x32xbf16>, vector<8x8xf32> -> vector<8x8xf32>
      %75 = arith.index_cast %arg16 : i32 to index
      %c0_41 = arith.constant 0 : index
      %c0_42 = arith.constant 0 : index
      %76 = vector.load %arg9[%75, %c0_41, %c0_42] : memref<4x1x8xf32, #tpu.memory_space<vmem>>, vector<1x1x8xf32>
      %77 = vector.shape_cast %76 : vector<1x1x8xf32> to vector<1x8xf32>
      %78 = vector.broadcast %77 : vector<1x8xf32> to vector<8x8xf32>
      %79 = arith.addf %74, %78 : vector<8x8xf32>
      %80 = arith.truncf %61 : vector<8x8xf32> to vector<8x8xbf16>
      %81 = arith.truncf %70 : vector<8x8xf32> to vector<8x8xbf16>
      %cst_43 = arith.constant dense<0.000000e+00> : vector<8x8xf32>
      %82 = tpu.matmul %80, %81, %cst_43 {dimension_numbers = #tpu.dot_dimension_numbers<[1], [1], [0], [0], [0, 0, 1, 0], [], []>} : vector<8x8xbf16>, vector<8x8xbf16>, vector<8x8xf32> -> vector<8x8xf32>
      %cst_44 = arith.constant dense<0xFF800000> : vector<8xf32>
      %83 = vector.multi_reduction <maximumf>, %82, %cst_44 [1] : vector<8x8xf32> to vector<8xf32>
      %84 = vector.shape_cast %83 : vector<8xf32> to vector<8x1xf32>
      %85 = vector.broadcast %84 : vector<8x1xf32> to vector<8x8xf32>
      %86 = arith.subf %82, %85 : vector<8x8xf32>
      %87 = math.exp %86 : vector<8x8xf32>
      %cst_45 = arith.constant dense<0.000000e+00> : vector<8xf32>
      %88 = vector.multi_reduction <add>, %87, %cst_45 [1] : vector<8x8xf32> to vector<8xf32>
      %89 = vector.shape_cast %88 : vector<8xf32> to vector<8x1xf32>
      %90 = tpu.reciprocal %89 {approx = true} : vector<8x1xf32> -> vector<8x1xf32>
      %91 = vector.broadcast %90 : vector<8x1xf32> to vector<8x8xf32>
      %92 = arith.mulf %87, %91 : vector<8x8xf32>
      %93 = arith.truncf %92 : vector<8x8xf32> to vector<8x8xbf16>
      %94 = arith.truncf %79 : vector<8x8xf32> to vector<8x8xbf16>
      %cst_46 = arith.constant dense<0.000000e+00> : vector<8x8xf32>
      %95 = tpu.matmul %93, %94, %cst_46 {dimension_numbers = #tpu.dot_dimension_numbers<[1], [0], [0], [1], [0, 0, 1, 1], [], []>} : vector<8x8xbf16>, vector<8x8xbf16>, vector<8x8xf32> -> vector<8x8xf32>
      %96 = arith.truncf %95 : vector<8x8xf32> to vector<8x8xbf16>
      %97 = arith.index_cast %arg16 : i32 to index
      %c0_47 = arith.constant 0 : index
      %c0_48 = arith.constant 0 : index
      %98 = vector.load %arg10[%97, %c0_47, %c0_48] : memref<4x8x32xbf16, #tpu.memory_space<vmem>>, vector<1x8x32xbf16>
      %99 = vector.shape_cast %98 : vector<1x8x32xbf16> to vector<8x32xbf16>
      %cst_49 = arith.constant dense<0.000000e+00> : vector<8x32xf32>
      %100 = tpu.matmul %96, %99, %cst_49 {dimension_numbers = #tpu.dot_dimension_numbers<[1], [0], [0], [1], [0, 0, 1, 1], [], []>} : vector<8x8xbf16>, vector<8x32xbf16>, vector<8x32xf32> -> vector<8x32xf32>
      %101 = arith.addf %arg17, %100 : vector<8x32xf32>
      %102 = arith.addf %arg18, %92 : vector<8x8xf32>
      scf.yield %101, %102 : vector<8x32xf32>, vector<8x8xf32>
    }
    %c4_i32_9 = arith.constant 4 : i32
    %c0_10 = arith.constant 0 : index
    %c0_11 = arith.constant 0 : index
    %17 = vector.load %arg11[%c0_10, %c0_11] : memref<1x32xf32, #tpu.memory_space<vmem>>, vector<1x32xf32>
    %18 = vector.broadcast %17 : vector<1x32xf32> to vector<8x32xf32>
    %19 = arith.addf %16#0, %18 : vector<8x32xf32>
    %20 = arith.addf %1, %19 : vector<8x32xf32>
    %cst_12 = arith.constant dense<0.000000e+00> : vector<8xf32>
    %21 = vector.multi_reduction <add>, %20, %cst_12 [1] : vector<8x32xf32> to vector<8xf32>
    %22 = vector.shape_cast %21 : vector<8xf32> to vector<8x1xf32>
    %cst_13 = arith.constant 3.200000e+01 : f32
    %23 = vector.broadcast %cst_13 : f32 to vector<8x1xf32>
    %24 = arith.divf %22, %23 : vector<8x1xf32>
    %25 = vector.broadcast %24 : vector<8x1xf32> to vector<8x32xf32>
    %26 = arith.subf %20, %25 : vector<8x32xf32>
    %27 = arith.mulf %26, %26 : vector<8x32xf32>
    %cst_14 = arith.constant dense<0.000000e+00> : vector<8xf32>
    %28 = vector.multi_reduction <add>, %27, %cst_14 [1] : vector<8x32xf32> to vector<8xf32>
    %29 = vector.shape_cast %28 : vector<8xf32> to vector<8x1xf32>
    %cst_15 = arith.constant 3.200000e+01 : f32
    %30 = vector.broadcast %cst_15 : f32 to vector<8x1xf32>
    %31 = arith.divf %29, %30 : vector<8x1xf32>
    %32 = vector.broadcast %24 : vector<8x1xf32> to vector<8x32xf32>
    %33 = arith.subf %20, %32 : vector<8x32xf32>
    %cst_16 = arith.constant 9.99999974E-6 : f32
    %34 = vector.broadcast %cst_16 : f32 to vector<8x1xf32>
    %35 = arith.addf %31, %34 : vector<8x1xf32>
    %36 = math.rsqrt %35 : vector<8x1xf32>
    %37 = vector.broadcast %36 : vector<8x1xf32> to vector<8x32xf32>
    %38 = arith.mulf %33, %37 : vector<8x32xf32>
    %c0_17 = arith.constant 0 : index
    %c0_18 = arith.constant 0 : index
    %39 = vector.load %arg12[%c0_17, %c0_18] : memref<1x32xf32, #tpu.memory_space<vmem>>, vector<1x32xf32>
    %40 = vector.broadcast %39 : vector<1x32xf32> to vector<8x32xf32>
    %41 = arith.mulf %38, %40 : vector<8x32xf32>
    %c0_19 = arith.constant 0 : index
    %c0_20 = arith.constant 0 : index
    %42 = vector.load %arg13[%c0_19, %c0_20] : memref<1x32xf32, #tpu.memory_space<vmem>>, vector<1x32xf32>
    %43 = vector.broadcast %42 : vector<1x32xf32> to vector<8x32xf32>
    %44 = arith.addf %41, %43 : vector<8x32xf32>
    %cst_21 = arith.constant 2.500000e-01 : f32
    %45 = vector.broadcast %cst_21 : f32 to vector<8x8xf32>
    %46 = arith.mulf %16#1, %45 : vector<8x8xf32>
    %c0_22 = arith.constant 0 : index
    %c0_23 = arith.constant 0 : index
    %c0_24 = arith.constant 0 : index
    %47 = vector.load %arg14[%c0_22, %c0_23, %c0_24] : memref<1x8x32xf32, #tpu.memory_space<vmem>>, vector<1x8x32xf32>
    %48 = vector.shape_cast %47 : vector<1x8x32xf32> to vector<8x32xf32>
    %49 = vector.shape_cast %44 : vector<8x32xf32> to vector<1x8x32xf32>
    tpu.vector_store %arg14[%c0_22, %c0_23, %c0_24], %49 {strides = array<i32>} : memref<1x8x32xf32, #tpu.memory_space<vmem>>, vector<1x8x32xf32>,
    %c0_25 = arith.constant 0 : index
    %c0_26 = arith.constant 0 : index
    %c0_27 = arith.constant 0 : index
    %50 = vector.load %arg15[%c0_25, %c0_26, %c0_27] : memref<1x8x8xf32, #tpu.memory_space<vmem>>, vector<1x8x8xf32>
    %51 = vector.shape_cast %50 : vector<1x8x8xf32> to vector<8x8xf32>
    %52 = vector.shape_cast %46 : vector<8x8xf32> to vector<1x8x8xf32>
    tpu.vector_store %arg15[%c0_25, %c0_26, %c0_27], %52 {strides = array<i32>} : memref<1x8x8xf32, #tpu.memory_space<vmem>>, vector<1x8x8xf32>,
    return
  }
  func.func @transform_0(%arg0: i32) -> (i32, i32, i32) {
    %c0_i32 = arith.constant 0 : i32
    %c0_i32_0 = arith.constant 0 : i32
    %c0_i32_1 = arith.constant 0 : i32
    return %arg0, %c0_i32, %c0_i32_0 : i32, i32, i32
  }
  func.func @transform_1(%arg0: i32) -> (i32, i32, i32) {
    %c0_i32 = arith.constant 0 : i32
    %c0_i32_0 = arith.constant 0 : i32
    %c0_i32_1 = arith.constant 0 : i32
    return %arg0, %c0_i32, %c0_i32_0 : i32, i32, i32
  }
  func.func @transform_2(%arg0: i32) -> (i32, i32, i32) {
    %c0_i32 = arith.constant 0 : i32
    %c0_i32_0 = arith.constant 0 : i32
    %c0_i32_1 = arith.constant 0 : i32
    return %arg0, %c0_i32, %c0_i32_0 : i32, i32, i32
  }
  func.func @transform_3(%arg0: i32) -> (i32, i32, i32) {
    %c0_i32 = arith.constant 0 : i32
    %c0_i32_0 = arith.constant 0 : i32
    %c0_i32_1 = arith.constant 0 : i32
    %c0_i32_2 = arith.constant 0 : i32
    return %c0_i32, %c0_i32_0, %c0_i32_1 : i32, i32, i32
  }
  func.func @transform_4(%arg0: i32) -> (i32, i32, i32) {
    %c0_i32 = arith.constant 0 : i32
    %c0_i32_0 = arith.constant 0 : i32
    %c0_i32_1 = arith.constant 0 : i32
    %c0_i32_2 = arith.constant 0 : i32
    return %c0_i32, %c0_i32_0, %c0_i32_1 : i32, i32, i32
  }
  func.func @transform_5(%arg0: i32) -> (i32, i32, i32) {
    %c0_i32 = arith.constant 0 : i32
    %c0_i32_0 = arith.constant 0 : i32
    %c0_i32_1 = arith.constant 0 : i32
    %c0_i32_2 = arith.constant 0 : i32
    return %c0_i32, %c0_i32_0, %c0_i32_1 : i32, i32, i32
  }
  func.func @transform_6(%arg0: i32) -> (i32, i32, i32) {
    %c0_i32 = arith.constant 0 : i32
    %c0_i32_0 = arith.constant 0 : i32
    %c0_i32_1 = arith.constant 0 : i32
    %c0_i32_2 = arith.constant 0 : i32
    return %c0_i32, %c0_i32_0, %c0_i32_1 : i32, i32, i32
  }
  func.func @transform_7(%arg0: i32) -> (i32, i32, i32) {
    %c0_i32 = arith.constant 0 : i32
    %c0_i32_0 = arith.constant 0 : i32
    %c0_i32_1 = arith.constant 0 : i32
    %c0_i32_2 = arith.constant 0 : i32
    return %c0_i32, %c0_i32_0, %c0_i32_1 : i32, i32, i32
  }
  func.func @transform_8(%arg0: i32) -> (i32, i32, i32) {
    %c0_i32 = arith.constant 0 : i32
    %c0_i32_0 = arith.constant 0 : i32
    %c0_i32_1 = arith.constant 0 : i32
    %c0_i32_2 = arith.constant 0 : i32
    return %c0_i32, %c0_i32_0, %c0_i32_1 : i32, i32, i32
  }
  func.func @transform_9(%arg0: i32) -> (i32, i32, i32) {
    %c0_i32 = arith.constant 0 : i32
    %c0_i32_0 = arith.constant 0 : i32
    %c0_i32_1 = arith.constant 0 : i32
    %c0_i32_2 = arith.constant 0 : i32
    return %c0_i32, %c0_i32_0, %c0_i32_1 : i32, i32, i32
  }
  func.func @transform_10(%arg0: i32) -> (i32, i32) {
    %c0_i32 = arith.constant 0 : i32
    %c0_i32_0 = arith.constant 0 : i32
    %c0_i32_1 = arith.constant 0 : i32
    return %c0_i32, %c0_i32_0 : i32, i32
  }
  func.func @transform_11(%arg0: i32) -> (i32, i32) {
    %c0_i32 = arith.constant 0 : i32
    %c0_i32_0 = arith.constant 0 : i32
    %c0_i32_1 = arith.constant 0 : i32
    return %c0_i32, %c0_i32_0 : i32, i32
  }
  func.func @transform_12(%arg0: i32) -> (i32, i32) {
    %c0_i32 = arith.constant 0 : i32
    %c0_i32_0 = arith.constant 0 : i32
    %c0_i32_1 = arith.constant 0 : i32
    return %c0_i32, %c0_i32_0 : i32, i32
  }
  func.func @transform_13(%arg0: i32) -> (i32, i32, i32) {
    %c0_i32 = arith.constant 0 : i32
    %c0_i32_0 = arith.constant 0 : i32
    %c0_i32_1 = arith.constant 0 : i32
    return %arg0, %c0_i32, %c0_i32_0 : i32, i32, i32
  }
  func.func @transform_14(%arg0: i32) -> (i32, i32, i32) {
    %c0_i32 = arith.constant 0 : i32
    %c0_i32_0 = arith.constant 0 : i32
    %c0_i32_1 = arith.constant 0 : i32
    return %arg0, %c0_i32, %c0_i32_0 : i32, i32, i32
  }
}

</mosaic_0001>

<llo_original>
// kernel: tpu_custom_call.1
$region0: #{tpu_custom_call.1}
  #allocation0 [shape = 'u32[]', space=smem, size = 0x4, offset = 0x4, fixed_abs, tag = 'smem constant byte address 0x4 - core index']
  #allocation1 [shape = 'u32[72,128]{1,0:T(1,128)}', space=vmem, size = 0x9000, scoped, tag = 'internal scratch']
  %s0 = inlined_call_operand.hbm [shape: f32[2,8,32], index: 0, kind: input, shape index: {}]
  %s1 = inlined_call_operand.hbm [shape: bf16[2,8,32], index: 1, kind: input, shape index: {}]
  %s2 = inlined_call_operand.hbm [shape: bf16[2,8,32], index: 2, kind: input, shape index: {}]
  %s3 = inlined_call_operand.hbm [shape: bf16[4,8,32], index: 3, kind: input, shape index: {}]
  %s4 = inlined_call_operand.hbm [shape: f32[4,1,8], index: 4, kind: input, shape index: {}]
  %s5 = inlined_call_operand.hbm [shape: bf16[4,8,32], index: 5, kind: input, shape index: {}]
  %s6 = inlined_call_operand.vmem [shape: f32[4,1,8], index: 6, kind: input, shape index: {}]
  %s7 = inlined_call_operand.hbm [shape: bf16[4,8,32], index: 7, kind: input, shape index: {}]
  %s8 = inlined_call_operand.hbm [shape: f32[4,1,8], index: 8, kind: input, shape index: {}]
  %s9 = inlined_call_operand.hbm [shape: bf16[4,8,32], index: 9, kind: input, shape index: {}]
  %s10 = inlined_call_operand.vmem [shape: f32[1,32], index: 10, kind: input, shape index: {}]
  %s11 = inlined_call_operand.vmem [shape: f32[1,32], index: 11, kind: input, shape index: {}]
  %s12 = inlined_call_operand.vmem [shape: f32[1,32], index: 12, kind: input, shape index: {}]
  %s13 = inlined_call_operand.hbm [shape: f32[2,8,32], index: 13, kind: output, shape index: {0}]
  %s14 = inlined_call_operand.hbm [shape: f32[2,8,8], index: 14, kind: output, shape index: {1}]
  %15 = xla_tuple %s13, %s14
  %s16 = sld [smem:[#allocation0]]
  $region136: #{tpu_custom_call.1} parent=0
    _
  %s18 = ssub.s32 1, %s16
  %s19 = scalar_select 0, %s18, %s16
  $region1: #{tpu_custom_call.1} parent=0
    #allocation2 [shape = 'u8[8192]{0}', space=vmem, size = 0x2000, scoped, tag = 'input window, operand 0']
    #allocation3 [shape = 's32[2]{0}', space=sflag, size = 0x8, scoped, tag = 'scoped memory for tpu_custom_call.1']
    #allocation4 [shape = 's32[2]{0}', space=sflag, size = 0x8, scoped, tag = 'scoped memory for tpu_custom_call.1']
    #allocation5 [shape = 'u8[4096]{0}', space=vmem, size = 0x1000, scoped, tag = 'input window, operand 1']
    #allocation6 [shape = 's32[2]{0}', space=sflag, size = 0x8, scoped, tag = 'scoped memory for tpu_custom_call.1']
    #allocation7 [shape = 'u8[4096]{0}', space=vmem, size = 0x1000, scoped, tag = 'input window, operand 2']
    #allocation8 [shape = 'u8[8192]{0}', space=vmem, size = 0x2000, scoped, tag = 'input window, operand 3, single buffered']
    #allocation9 [shape = 's32[1]{0}', space=sflag, size = 0x4, scoped, tag = 'scoped memory for tpu_custom_call.1']
    #allocation10 [shape = 'u8[2048]{0}', space=vmem, size = 0x800, scoped, tag = 'input window, operand 4, single buffered']
    #allocation11 [shape = 'u8[8192]{0}', space=vmem, size = 0x2000, scoped, tag = 'input window, operand 5, single buffered']
    #allocation12 [shape = 's32[1]{0}', space=sflag, size = 0x4, scoped, tag = 'scoped memory for tpu_custom_call.1']
    #allocation13 [shape = 'u8[8192]{0}', space=vmem, size = 0x2000, scoped, tag = 'input window, operand 7, single buffered']
    #allocation14 [shape = 'u8[2048]{0}', space=vmem, size = 0x800, scoped, tag = 'input window, operand 8, single buffered']
    #allocation15 [shape = 's32[1]{0}', space=sflag, size = 0x4, scoped, tag = 'scoped memory for tpu_custom_call.1']
    #allocation16 [shape = 'u8[8192]{0}', space=vmem, size = 0x2000, scoped, tag = 'input window, operand 9, single buffered']
    #allocation17 [shape = 'u8[8192]{0}', space=vmem, size = 0x2000, scoped, tag = 'output window, operand 0']
    #allocation18 [shape = 'u8[8192]{0}', space=vmem, size = 0x2000, scoped, tag = 'output window, operand 1']
    #allocation19 [shape = 's32[2]{0}', space=sflag, size = 0x8, scoped, tag = 'scoped memory for tpu_custom_call.1']
    %20 = vsyncpa [#allocation3], 0
    %s21 = scalar_lea.sflag [#allocation3], 1
    %22 = vsyncpa %s21, 0
    %23 = vsyncpa [#allocation6], 0
    %s24 = scalar_lea.sflag [#allocation6], 1
    %25 = vsyncpa %s24, 0
    %26 = vsyncpa [#allocation9], 0
    %27 = vsyncpa [#allocation12], 0
    %28 = vsyncpa [#allocation15], 0
    %29 = vsyncpa [#allocation4], 0
    %s30 = scalar_lea.sflag [#allocation4], 1
    %31 = vsyncpa %s30, 0
    %32 = vsyncpa [#allocation19], 0
    %s33 = scalar_lea.sflag [#allocation19], 1
    %34 = vsyncpa %s33, 0
    loop: start=0, step=1, limit=4
    $region2: #{tpu_custom_call.1} parent=1 // loop_pre_header
      _
    $region3: #{tpu_custom_call.1} parent=1 // loop_header
      %s36 = sphi 0, %s40
      %p37 = scmp.ge.s32.totalorder %s36, 4
      %s46 = sphi 0, %s48
      %s49 = sphi 0, %s46
      %s50 = sphi 0, %s49
      %s66 = sphi 0, %s50
      %s72 = sphi 0, %s74
      %s75 = sphi 0, %s72
      %s76 = sphi 0, %s75
      %s92 = sphi 0, %s76
      %s98 = sphi 0, %s100
      %s101 = sphi 0, %s98
      %s102 = sphi 0, %s101
      %s118 = sphi 0, %s102
      %s122 = sphi 0, %s122
      %s124 = sphi 0, %s122
      %s125 = sphi 0, %s124
      %s139 = sphi 0, %s125
      %s143 = sphi 0, %s143
      %s145 = sphi 0, %s143
      %s146 = sphi 0, %s145
      %s160 = sphi 0, %s146
      %s164 = sphi 0, %s164
      %s166 = sphi 0, %s164
      %s167 = sphi 0, %s166
      %s181 = sphi 0, %s167
      %s185 = sphi 0, %s185
      %s187 = sphi 0, %s185
      %s188 = sphi 0, %s187
      %s202 = sphi 0, %s188
      %s206 = sphi 0, %s206
      %s208 = sphi 0, %s206
      %s209 = sphi 0, %s208
      %s223 = sphi 0, %s209
      %s227 = sphi 0, %s227
      %s229 = sphi 0, %s227
      %s230 = sphi 0, %s229
      %s244 = sphi 0, %s230
      %s248 = sphi 0, %s248
      %s250 = sphi 0, %s248
      %s251 = sphi 0, %s250
      %s265 = sphi 0, %s251
      %s269 = sphi 0, %s269
      %s271 = sphi 0, %s269
      %s272 = sphi 0, %s271
      %s286 = sphi 0, %s272
      %s290 = sphi 0, %s290
      %s292 = sphi 0, %s290
      %s293 = sphi 0, %s292
      %s307 = sphi 0, %s293
      %s311 = sphi 0, %s311
      %s313 = sphi 0, %s311
      %s314 = sphi 0, %s313
      %s328 = sphi 0, %s314
      %s334 = sphi 0, %s336
      %s337 = sphi 0, %s334
      %s338 = sphi 0, %s337
      %s354 = sphi 0, %s338
      %s360 = sphi 0, %s362
      %s363 = sphi 0, %s360
      %s364 = sphi 0, %s363
      %s380 = sphi 0, %s364
    $region4: #{tpu_custom_call.1} parent=1 // loop_header_branch
      %39 = sbr.rel (%p37) target = $region8
    $region5: #{tpu_custom_call.1} parent=1 // loop_body
      %s41 = ssub.s32 %s36, 1
      %s42 = ssub.s32 %s36, 2
      %s43 = sadd.s32 %s36, 1
      %s44 = ssub.s32 %s36, %s43
      %p45 = scmp.eq.s32.totalorder %s44, 0
      %s47 = sadd.s32 %s46, 1
      %s48 = scalar_select %p45, %s46, %s47
      %p51 = pneg %p45
      %p52 = scmp.eq.s32.totalorder %s36, 1
      %p53 = por %p51, %p52
      %p54 = scmp.ne.s32.totalorder %s46, %s49
      %p55 = scmp.eq.s32.totalorder %s36, 0
      %p56 = por %p54, %p55
      %p57 = scmp.ne.s32.totalorder %s46, %s49
      %p58 = scmp.eq.s32.totalorder %s41, 1
      %p59 = por %p57, %p58
      %p60 = scmp.ne.s32.totalorder %s49, %s50
      %p61 = scmp.eq.s32.totalorder %s41, 0
      %p62 = por %p60, %p61
      %p63 = scmp.ne.s32.totalorder %s49, %s50
      %p64 = scmp.eq.s32.totalorder %s42, 1
      %p65 = por %p63, %p64
      %p67 = scmp.ne.s32.totalorder %s50, %s66
      %p68 = scmp.eq.s32.totalorder %s42, 0
      %p69 = por %p67, %p68
      %s70 = ssub.s32 %s36, %s43
      %p71 = scmp.eq.s32.totalorder %s70, 0
      %s73 = sadd.s32 %s72, 1
      %s74 = scalar_select %p71, %s72, %s73
      %p77 = pneg %p71
      %p78 = scmp.eq.s32.totalorder %s36, 1
      %p79 = por %p77, %p78
      %p80 = scmp.ne.s32.totalorder %s72, %s75
      %p81 = scmp.eq.s32.totalorder %s36, 0
      %p82 = por %p80, %p81
      %p83 = scmp.ne.s32.totalorder %s72, %s75
      %p84 = scmp.eq.s32.totalorder %s41, 1
      %p85 = por %p83, %p84
      %p86 = scmp.ne.s32.totalorder %s75, %s76
      %p87 = scmp.eq.s32.totalorder %s41, 0
      %p88 = por %p86, %p87
      %p89 = scmp.ne.s32.totalorder %s75, %s76
      %p90 = scmp.eq.s32.totalorder %s42, 1
      %p91 = por %p89, %p90
      %p93 = scmp.ne.s32.totalorder %s76, %s92
      %p94 = scmp.eq.s32.totalorder %s42, 0
      %p95 = por %p93, %p94
      %s96 = ssub.s32 %s36, %s43
      %p97 = scmp.eq.s32.totalorder %s96, 0
      %s99 = sadd.s32 %s98, 1
      %s100 = scalar_select %p97, %s98, %s99
      %p103 = pneg %p97
      %p104 = scmp.eq.s32.totalorder %s36, 1
      %p105 = por %p103, %p104
      %p106 = scmp.ne.s32.totalorder %s98, %s101
      %p107 = scmp.eq.s32.totalorder %s36, 0
      %p108 = por %p106, %p107
      %p109 = scmp.ne.s32.totalorder %s98, %s101
      %p110 = scmp.eq.s32.totalorder %s41, 1
      %p111 = por %p109, %p110
      %p112 = scmp.ne.s32.totalorder %s101, %s102
      %p113 = scmp.eq.s32.totalorder %s41, 0
      %p114 = por %p112, %p113
      %p115 = scmp.ne.s32.totalorder %s101, %s102
      %p116 = scmp.eq.s32.totalorder %s42, 1
      %p117 = por %p115, %p116
      %p119 = scmp.ne.s32.totalorder %s102, %s118
      %p120 = scmp.eq.s32.totalorder %s42, 0
      %p121 = por %p119, %p120
      %s123 = sadd.s32 %s122, 1
      %p126 = scmp.eq.s32.totalorder %s36, 1
      %p127 = scmp.ne.s32.totalorder %s122, %s124
      %p128 = scmp.eq.s32.totalorder %s36, 0
      %p129 = por %p127, %p128
      %p130 = scmp.ne.s32.totalorder %s122, %s124
      %p131 = scmp.eq.s32.totalorder %s41, 1
      %p132 = por %p130, %p131
      %p133 = scmp.ne.s32.totalorder %s124, %s125
      %p134 = scmp.eq.s32.totalorder %s41, 0
      %p135 = por %p133, %p134
      %p136 = scmp.ne.s32.totalorder %s124, %s125
      %p137 = scmp.eq.s32.totalorder %s42, 1
      %p138 = por %p136, %p137
      %p140 = scmp.ne.s32.totalorder %s125, %s139
      %p141 = scmp.eq.s32.totalorder %s42, 0
      %p142 = por %p140, %p141
      %s144 = sadd.s32 %s143, 1
      %p147 = scmp.eq.s32.totalorder %s36, 1
      %p148 = scmp.ne.s32.totalorder %s143, %s145
      %p149 = scmp.eq.s32.totalorder %s36, 0
      %p150 = por %p148, %p149
      %p151 = scmp.ne.s32.totalorder %s143, %s145
      %p152 = scmp.eq.s32.totalorder %s41, 1
      %p153 = por %p151, %p152
      %p154 = scmp.ne.s32.totalorder %s145, %s146
      %p155 = scmp.eq.s32.totalorder %s41, 0
      %p156 = por %p154, %p155
      %p157 = scmp.ne.s32.totalorder %s145, %s146
      %p158 = scmp.eq.s32.totalorder %s42, 1
      %p159 = por %p157, %p158
      %p161 = scmp.ne.s32.totalorder %s146, %s160
      %p162 = scmp.eq.s32.totalorder %s42, 0
      %p163 = por %p161, %p162
      %s165 = sadd.s32 %s164, 1
      %p168 = scmp.eq.s32.totalorder %s36, 1
      %p169 = scmp.ne.s32.totalorder %s164, %s166
      %p170 = scmp.eq.s32.totalorder %s36, 0
      %p171 = por %p169, %p170
      %p172 = scmp.ne.s32.totalorder %s164, %s166
      %p173 = scmp.eq.s32.totalorder %s41, 1
      %p174 = por %p172, %p173
      %p175 = scmp.ne.s32.totalorder %s166, %s167
      %p176 = scmp.eq.s32.totalorder %s41, 0
      %p177 = por %p175, %p176
      %p178 = scmp.ne.s32.totalorder %s166, %s167
      %p179 = scmp.eq.s32.totalorder %s42, 1
      %p180 = por %p178, %p179
      %p182 = scmp.ne.s32.totalorder %s167, %s181
      %p183 = scmp.eq.s32.totalorder %s42, 0
      %p184 = por %p182, %p183
      %s186 = sadd.s32 %s185, 1
      %p189 = scmp.eq.s32.totalorder %s36, 1
      %p190 = scmp.ne.s32.totalorder %s185, %s187
      %p191 = scmp.eq.s32.totalorder %s36, 0
      %p192 = por %p190, %p191
      %p193 = scmp.ne.s32.totalorder %s185, %s187
      %p194 = scmp.eq.s32.totalorder %s41, 1
      %p195 = por %p193, %p194
      %p196 = scmp.ne.s32.totalorder %s187, %s188
      %p197 = scmp.eq.s32.totalorder %s41, 0
      %p198 = por %p196, %p197
      %p199 = scmp.ne.s32.totalorder %s187, %s188
      %p200 = scmp.eq.s32.totalorder %s42, 1
      %p201 = por %p199, %p200
      %p203 = scmp.ne.s32.totalorder %s188, %s202
      %p204 = scmp.eq.s32.totalorder %s42, 0
      %p205 = por %p203, %p204
      %s207 = sadd.s32 %s206, 1
      %p210 = scmp.eq.s32.totalorder %s36, 1
      %p211 = scmp.ne.s32.totalorder %s206, %s208
      %p212 = scmp.eq.s32.totalorder %s36, 0
      %p213 = por %p211, %p212
      %p214 = scmp.ne.s32.totalorder %s206, %s208
      %p215 = scmp.eq.s32.totalorder %s41, 1
      %p216 = por %p214, %p215
      %p217 = scmp.ne.s32.totalorder %s208, %s209
      %p218 = scmp.eq.s32.totalorder %s41, 0
      %p219 = por %p217, %p218
      %p220 = scmp.ne.s32.totalorder %s208, %s209
      %p221 = scmp.eq.s32.totalorder %s42, 1
      %p222 = por %p220, %p221
      %p224 = scmp.ne.s32.totalorder %s209, %s223
      %p225 = scmp.eq.s32.totalorder %s42, 0
      %p226 = por %p224, %p225
      %s228 = sadd.s32 %s227, 1
      %p231 = scmp.eq.s32.totalorder %s36, 1
      %p232 = scmp.ne.s32.totalorder %s227, %s229
      %p233 = scmp.eq.s32.totalorder %s36, 0
      %p234 = por %p232, %p233
      %p235 = scmp.ne.s32.totalorder %s227, %s229
      %p236 = scmp.eq.s32.totalorder %s41, 1
      %p237 = por %p235, %p236
      %p238 = scmp.ne.s32.totalorder %s229, %s230
      %p239 = scmp.eq.s32.totalorder %s41, 0
      %p240 = por %p238, %p239
      %p241 = scmp.ne.s32.totalorder %s229, %s230
      %p242 = scmp.eq.s32.totalorder %s42, 1
      %p243 = por %p241, %p242
      %p245 = scmp.ne.s32.totalorder %s230, %s244
      %p246 = scmp.eq.s32.totalorder %s42, 0
      %p247 = por %p245, %p246
      %s249 = sadd.s32 %s248, 1
      %p252 = scmp.eq.s32.totalorder %s36, 1
      %p253 = scmp.ne.s32.totalorder %s248, %s250
      %p254 = scmp.eq.s32.totalorder %s36, 0
      %p255 = por %p253, %p254
      %p256 = scmp.ne.s32.totalorder %s248, %s250
      %p257 = scmp.eq.s32.totalorder %s41, 1
      %p258 = por %p256, %p257
      %p259 = scmp.ne.s32.totalorder %s250, %s251
      %p260 = scmp.eq.s32.totalorder %s41, 0
      %p261 = por %p259, %p260
      %p262 = scmp.ne.s32.totalorder %s250, %s251
      %p263 = scmp.eq.s32.totalorder %s42, 1
      %p264 = por %p262, %p263
      %p266 = scmp.ne.s32.totalorder %s251, %s265
      %p267 = scmp.eq.s32.totalorder %s42, 0
      %p268 = por %p266, %p267
      %s270 = sadd.s32 %s269, 1
      %p273 = scmp.eq.s32.totalorder %s36, 1
      %p274 = scmp.ne.s32.totalorder %s269, %s271
      %p275 = scmp.eq.s32.totalorder %s36, 0
      %p276 = por %p274, %p275
      %p277 = scmp.ne.s32.totalorder %s269, %s271
      %p278 = scmp.eq.s32.totalorder %s41, 1
      %p279 = por %p277, %p278
      %p280 = scmp.ne.s32.totalorder %s271, %s272
      %p281 = scmp.eq.s32.totalorder %s41, 0
      %p282 = por %p280, %p281
      %p283 = scmp.ne.s32.totalorder %s271, %s272
      %p284 = scmp.eq.s32.totalorder %s42, 1
      %p285 = por %p283, %p284
      %p287 = scmp.ne.s32.totalorder %s272, %s286
      %p288 = scmp.eq.s32.totalorder %s42, 0
      %p289 = por %p287, %p288
      %s291 = sadd.s32 %s290, 1
      %p294 = scmp.eq.s32.totalorder %s36, 1
      %p295 = scmp.ne.s32.totalorder %s290, %s292
      %p296 = scmp.eq.s32.totalorder %s36, 0
      %p297 = por %p295, %p296
      %p298 = scmp.ne.s32.totalorder %s290, %s292
      %p299 = scmp.eq.s32.totalorder %s41, 1
      %p300 = por %p298, %p299
      %p301 = scmp.ne.s32.totalorder %s292, %s293
      %p302 = scmp.eq.s32.totalorder %s41, 0
      %p303 = por %p301, %p302
      %p304 = scmp.ne.s32.totalorder %s292, %s293
      %p305 = scmp.eq.s32.totalorder %s42, 1
      %p306 = por %p304, %p305
      %p308 = scmp.ne.s32.totalorder %s293, %s307
      %p309 = scmp.eq.s32.totalorder %s42, 0
      %p310 = por %p308, %p309
      %s312 = sadd.s32 %s311, 1
      %p315 = scmp.eq.s32.totalorder %s36, 1
      %p316 = scmp.ne.s32.totalorder %s311, %s313
      %p317 = scmp.eq.s32.totalorder %s36, 0
      %p318 = por %p316, %p317
      %p319 = scmp.ne.s32.totalorder %s311, %s313
      %p320 = scmp.eq.s32.totalorder %s41, 1
      %p321 = por %p319, %p320
      %p322 = scmp.ne.s32.totalorder %s313, %s314
      %p323 = scmp.eq.s32.totalorder %s41, 0
      %p324 = por %p322, %p323
      %p325 = scmp.ne.s32.totalorder %s313, %s314
      %p326 = scmp.eq.s32.totalorder %s42, 1
      %p327 = por %p325, %p326
      %p329 = scmp.ne.s32.totalorder %s314, %s328
      %p330 = scmp.eq.s32.totalorder %s42, 0
      %p331 = por %p329, %p330
      %s332 = ssub.s32 %s36, %s43
      %p333 = scmp.eq.s32.totalorder %s332, 0
      %s335 = sadd.s32 %s334, 1
      %s336 = scalar_select %p333, %s334, %s335
      %p339 = pneg %p333
      %p340 = scmp.eq.s32.totalorder %s36, 1
      %p341 = por %p339, %p340
      %p342 = scmp.ne.s32.totalorder %s334, %s337
      %p343 = scmp.eq.s32.totalorder %s36, 0
      %p344 = por %p342, %p343
      %p345 = scmp.ne.s32.totalorder %s334, %s337
      %p346 = scmp.eq.s32.totalorder %s41, 1
      %p347 = por %p345, %p346
      %p348 = scmp.ne.s32.totalorder %s337, %s338
      %p349 = scmp.eq.s32.totalorder %s41, 0
      %p350 = por %p348, %p349
      %p351 = scmp.ne.s32.totalorder %s337, %s338
      %p352 = scmp.eq.s32.totalorder %s42, 1
      %p353 = por %p351, %p352
      %p355 = scmp.ne.s32.totalorder %s338, %s354
      %p356 = scmp.eq.s32.totalorder %s42, 0
      %p357 = por %p355, %p356
      %s358 = ssub.s32 %s36, %s43
      %p359 = scmp.eq.s32.totalorder %s358, 0
      %s361 = sadd.s32 %s360, 1
      %s362 = scalar_select %p359, %s360, %s361
      %p365 = pneg %p359
      %p366 = scmp.eq.s32.totalorder %s36, 1
      %p367 = por %p365, %p366
      %p368 = scmp.ne.s32.totalorder %s360, %s363
      %p369 = scmp.eq.s32.totalorder %s36, 0
      %p370 = por %p368, %p369
      %p371 = scmp.ne.s32.totalorder %s360, %s363
      %p372 = scmp.eq.s32.totalorder %s41, 1
      %p373 = por %p371, %p372
      %p374 = scmp.ne.s32.totalorder %s363, %s364
      %p375 = scmp.eq.s32.totalorder %s41, 0
      %p376 = por %p374, %p375
      %p377 = scmp.ne.s32.totalorder %s363, %s364
      %p378 = scmp.eq.s32.totalorder %s42, 1
      %p379 = por %p377, %p378
      %p381 = scmp.ne.s32.totalorder %s364, %s380
      %p382 = scmp.eq.s32.totalorder %s42, 0
      %p383 = por %p381, %p382
      %p384 = scmp.le.s32.totalorder 1, %s36
      %p385 = scmp.lt.s32.totalorder %s36, 3
      %p386 = pnand %p384, %p385
      %p387 = pneg %p386
      // Predicated region
      $region9: #{tpu_custom_call.1} parent=5 // pred_check
        _
      $region10: #{tpu_custom_call.1} parent=5 // pred_check_branch
        %389 = sbr.rel (%p386) target = $region12
      $region11: #{tpu_custom_call.1} parent=5 // pred_region
        %s390 = ssub.s32 %s36, 1
        // Predicated region
        $region13: #{tpu_custom_call.1} parent=11 // pred_check
          %p391 = pneg %p135
        $region14: #{tpu_custom_call.1} parent=11 // pred_check_branch
          %393 = sbr.rel (%p391) target = $region16
        $region15: #{tpu_custom_call.1} parent=11 // pred_region
          %395 = vsyncadd [#allocation9], 0
          %s396 = sshll.u32 %s3, 4
          %s397 = int_to_ptr.hbm [resolvable:$true] %s396
          %s398 = sshll.u32 [#allocation8], 4
          %s399 = int_to_ptr.vmem [resolvable:$true] %s398
          %404 = dma.hbm_to_vmem [thread:$0]  %s397, 256, %s399, [#allocation9], 64, 64, 4
        $region16: #{tpu_custom_call.1} parent=11 // pred_fallthru
          _
        // Predicated region
        $region17: #{tpu_custom_call.1} parent=11 // pred_check
          %p405 = pneg %p156
        $region18: #{tpu_custom_call.1} parent=11 // pred_check_branch
          %407 = sbr.rel (%p405) target = $region20
        $region19: #{tpu_custom_call.1} parent=11 // pred_region
          %409 = vsyncadd [#allocation9], 0
          %s410 = sshll.u32 %s4, 4
          %s411 = int_to_ptr.hbm [resolvable:$true] %s410
          %s412 = sshll.u32 [#allocation10], 4
          %s413 = int_to_ptr.vmem [resolvable:$true] %s412
          %418 = dma.hbm_to_vmem [thread:$0]  %s411, 64, %s413, [#allocation9], 16, 16, 1
        $region20: #{tpu_custom_call.1} parent=11 // pred_fallthru
          _
        // Predicated region
        $region21: #{tpu_custom_call.1} parent=11 // pred_check
          %p419 = pneg %p177
        $region22: #{tpu_custom_call.1} parent=11 // pred_check_branch
          %421 = sbr.rel (%p419) target = $region24
        $region23: #{tpu_custom_call.1} parent=11 // pred_region
          %423 = vsyncadd [#allocation12], 0
          %s424 = sshll.u32 %s5, 4
          %s425 = int_to_ptr.hbm [resolvable:$true] %s424
          %s426 = sshll.u32 [#allocation11], 4
          %s427 = int_to_ptr.vmem [resolvable:$true] %s426
          %432 = dma.hbm_to_vmem [thread:$0]  %s425, 256, %s427, [#allocation12], 64, 64, 4
        $region24: #{tpu_custom_call.1} parent=11 // pred_fallthru
          _
        // Predicated region
        $region25: #{tpu_custom_call.1} parent=11 // pred_check
          %p433 = pneg %p198
        $region26: #{tpu_custom_call.1} parent=11 // pred_check_branch
          %435 = sbr.rel (%p433) target = $region28
        $region27: #{tpu_custom_call.1} parent=11 // pred_region
          _
        $region28: #{tpu_custom_call.1} parent=11 // pred_fallthru
          _
        // Predicated region
        $region29: #{tpu_custom_call.1} parent=11 // pred_check
          %p436 = pneg %p219
        $region30: #{tpu_custom_call.1} parent=11 // pred_check_branch
          %438 = sbr.rel (%p436) target = $region32
        $region31: #{tpu_custom_call.1} parent=11 // pred_region
          %440 = vsyncadd [#allocation12], 0
          %s441 = sshll.u32 %s7, 4
          %s442 = int_to_ptr.hbm [resolvable:$true] %s441
          %s443 = sshll.u32 [#allocation13], 4
          %s444 = int_to_ptr.vmem [resolvable:$true] %s443
          %449 = dma.hbm_to_vmem [thread:$0]  %s442, 256, %s444, [#allocation12], 64, 64, 4
        $region32: #{tpu_custom_call.1} parent=11 // pred_fallthru
          _
        // Predicated region
        $region33: #{tpu_custom_call.1} parent=11 // pred_check
          %p450 = pneg %p240
        $region34: #{tpu_custom_call.1} parent=11 // pred_check_branch
          %452 = sbr.rel (%p450) target = $region36
        $region35: #{tpu_custom_call.1} parent=11 // pred_region
          %454 = vsyncadd [#allocation15], 0
          %s455 = sshll.u32 %s8, 4
          %s456 = int_to_ptr.hbm [resolvable:$true] %s455
          %s457 = sshll.u32 [#allocation14], 4
          %s458 = int_to_ptr.vmem [resolvable:$true] %s457
          %463 = dma.hbm_to_vmem [thread:$0]  %s456, 64, %s458, [#allocation15], 16, 16, 1
        $region36: #{tpu_custom_call.1} parent=11 // pred_fallthru
          _
        // Predicated region
        $region37: #{tpu_custom_call.1} parent=11 // pred_check
          %p464 = pneg %p261
        $region38: #{tpu_custom_call.1} parent=11 // pred_check_branch
          %466 = sbr.rel (%p464) target = $region40
        $region39: #{tpu_custom_call.1} parent=11 // pred_region
          %468 = vsyncadd [#allocation15], 0
          %s469 = sshll.u32 %s9, 4
          %s470 = int_to_ptr.hbm [resolvable:$true] %s469
          %s471 = sshll.u32 [#allocation16], 4
          %s472 = int_to_ptr.vmem [resolvable:$true] %s471
          %477 = dma.hbm_to_vmem [thread:$0]  %s470, 256, %s472, [#allocation15], 64, 64, 4
        $region40: #{tpu_custom_call.1} parent=11 // pred_fallthru
          _
        // Predicated region
        $region41: #{tpu_custom_call.1} parent=11 // pred_check
          %p478 = pneg %p282
        $region42: #{tpu_custom_call.1} parent=11 // pred_check_branch
          %480 = sbr.rel (%p478) target = $region44
        $region43: #{tpu_custom_call.1} parent=11 // pred_region
          _
        $region44: #{tpu_custom_call.1} parent=11 // pred_fallthru
          _
        // Predicated region
        $region45: #{tpu_custom_call.1} parent=11 // pred_check
          %p481 = pneg %p303
        $region46: #{tpu_custom_call.1} parent=11 // pred_check_branch
          %483 = sbr.rel (%p481) target = $region48
        $region47: #{tpu_custom_call.1} parent=11 // pred_region
          _
        $region48: #{tpu_custom_call.1} parent=11 // pred_fallthru
          _
        // Predicated region
        $region49: #{tpu_custom_call.1} parent=11 // pred_check
          %p484 = pneg %p324
        $region50: #{tpu_custom_call.1} parent=11 // pred_check_branch
          %486 = sbr.rel (%p484) target = $region52
        $region51: #{tpu_custom_call.1} parent=11 // pred_region
          _
        $region52: #{tpu_custom_call.1} parent=11 // pred_fallthru
          _
      $region12: #{tpu_custom_call.1} parent=5 // pred_fallthru
        _
      %p487 = scmp.lt.s32.totalorder %s36, 2
      // Predicated region
      $region53: #{tpu_custom_call.1} parent=5 // pred_check
        %p488 = pneg %p487
      $region54: #{tpu_custom_call.1} parent=5 // pred_check_branch
        %490 = sbr.rel (%p488) target = $region56
      $region55: #{tpu_custom_call.1} parent=5 // pred_region
        // Predicated region
        $region57: #{tpu_custom_call.1} parent=55 // pred_check
          %p491 = pneg %p56
        $region58: #{tpu_custom_call.1} parent=55 // pred_check_branch
          %493 = sbr.rel (%p491) target = $region60
        $region59: #{tpu_custom_call.1} parent=55 // pred_region
          %s494 = sand.u32 %s46, 1
          %s495 = scalar_lea.sflag [#allocation3], %s494
          %s496 = sand.u32 %s46, 1
          %s497 = smul.addr %s496, 8
          %s498 = scalar_lea.vmem [#allocation2], %s497
          %500 = vsyncadd %s495, 0
          %s501 = smul.addr %s36, 8
          %s502 = scalar_lea.hbm %s0, %s501
          %s504 = sshll.u32 %s502, 4
          %s505 = int_to_ptr.hbm [resolvable:$true] %s504
          %s506 = sshll.u32 %s498, 4
          %s507 = int_to_ptr.vmem [resolvable:$true] %s506
          %509 = dma.hbm_to_vmem [thread:$0]  %s505, 128, %s507, %s495
        $region60: #{tpu_custom_call.1} parent=55 // pred_fallthru
          _
        // Predicated region
        $region61: #{tpu_custom_call.1} parent=55 // pred_check
          %p510 = pneg %p82
        $region62: #{tpu_custom_call.1} parent=55 // pred_check_branch
          %512 = sbr.rel (%p510) target = $region64
        $region63: #{tpu_custom_call.1} parent=55 // pred_region
          %s513 = sand.u32 %s36, 1
          %s514 = scalar_lea.sflag [#allocation6], %s513
          %s515 = sand.u32 %s72, 1
          %s516 = smul.addr %s515, 4
          %s517 = scalar_lea.vmem [#allocation5], %s516
          %519 = vsyncadd %s514, 0
          %s520 = smul.addr %s36, 4
          %s521 = scalar_lea.hbm %s1, %s520
          %s523 = sshll.u32 %s521, 4
          %s524 = int_to_ptr.hbm [resolvable:$true] %s523
          %s525 = sshll.u32 %s517, 4
          %s526 = int_to_ptr.vmem [resolvable:$true] %s525
          %528 = dma.hbm_to_vmem [thread:$0]  %s524, 64, %s526, %s514
        $region64: #{tpu_custom_call.1} parent=55 // pred_fallthru
          _
        // Predicated region
        $region65: #{tpu_custom_call.1} parent=55 // pred_check
          %p529 = pneg %p108
        $region66: #{tpu_custom_call.1} parent=55 // pred_check_branch
          %531 = sbr.rel (%p529) target = $region68
        $region67: #{tpu_custom_call.1} parent=55 // pred_region
          %s532 = sand.u32 %s36, 1
          %s533 = scalar_lea.sflag [#allocation6], %s532
          %s534 = sand.u32 %s98, 1
          %s535 = smul.addr %s534, 4
          %s536 = scalar_lea.vmem [#allocation7], %s535
          %538 = vsyncadd %s533, 0
          %s539 = smul.addr %s36, 4
          %s540 = scalar_lea.hbm %s2, %s539
          %s542 = sshll.u32 %s540, 4
          %s543 = int_to_ptr.hbm [resolvable:$true] %s542
          %s544 = sshll.u32 %s536, 4
          %s545 = int_to_ptr.vmem [resolvable:$true] %s544
          %547 = dma.hbm_to_vmem [thread:$0]  %s543, 64, %s545, %s533
        $region68: #{tpu_custom_call.1} parent=55 // pred_fallthru
          _
      $region56: #{tpu_custom_call.1} parent=5 // pred_fallthru
        _
      %p548 = scmp.le.s32.totalorder 1, %s36
      %p549 = scmp.lt.s32.totalorder %s36, 3
      %p550 = pnand %p548, %p549
      %p551 = pneg %p550
      // Predicated region
      $region69: #{tpu_custom_call.1} parent=5 // pred_check
        _
      $region70: #{tpu_custom_call.1} parent=5 // pred_check_branch
        %553 = sbr.rel (%p550) target = $region72
      $region71: #{tpu_custom_call.1} parent=5 // pred_region
        %s554 = ssub.s32 %s36, 1
        %s555 = sand.u32 %s49, 1
        %s556 = scalar_lea.sflag [#allocation3], %s555
        %s557 = sand.u32 %s49, 1
        %s558 = smul.addr %s557, 8
        %s559 = scalar_lea.vmem [#allocation2], %s558
        // Predicated region
        $region73: #{tpu_custom_call.1} parent=71 // pred_check
          %p560 = pneg %p62
        $region74: #{tpu_custom_call.1} parent=71 // pred_check_branch
          %562 = sbr.rel (%p560) target = $region76
        $region75: #{tpu_custom_call.1} parent=71 // pred_region
          %564 = dma.done %s556, 128
        $region76: #{tpu_custom_call.1} parent=71 // pred_fallthru
          _
        %s565 = sand.u32 %s41, 1
        %s566 = scalar_lea.sflag [#allocation6], %s565
        %s567 = sand.u32 %s75, 1
        %s568 = smul.addr %s567, 4
        %s569 = scalar_lea.vmem [#allocation5], %s568
        // Predicated region
        $region77: #{tpu_custom_call.1} parent=71 // pred_check
          %p570 = pneg %p88
        $region78: #{tpu_custom_call.1} parent=71 // pred_check_branch
          %572 = sbr.rel (%p570) target = $region80
        $region79: #{tpu_custom_call.1} parent=71 // pred_region
          %574 = dma.done %s566, 64
        $region80: #{tpu_custom_call.1} parent=71 // pred_fallthru
          _
        %s575 = sand.u32 %s41, 1
        %s576 = scalar_lea.sflag [#allocation6], %s575
        %s577 = sand.u32 %s101, 1
        %s578 = smul.addr %s577, 4
        %s579 = scalar_lea.vmem [#allocation7], %s578
        // Predicated region
        $region81: #{tpu_custom_call.1} parent=71 // pred_check
          %p580 = pneg %p114
        $region82: #{tpu_custom_call.1} parent=71 // pred_check_branch
          %582 = sbr.rel (%p580) target = $region84
        $region83: #{tpu_custom_call.1} parent=71 // pred_region
          %584 = dma.done %s576, 64
        $region84: #{tpu_custom_call.1} parent=71 // pred_fallthru
          _
        // Predicated region
        $region85: #{tpu_custom_call.1} parent=71 // pred_check
          %p585 = pneg %p135
        $region86: #{tpu_custom_call.1} parent=71 // pred_check_branch
          %587 = sbr.rel (%p585) target = $region88
        $region87: #{tpu_custom_call.1} parent=71 // pred_region
          %589 = dma.done [#allocation9], 256
        $region88: #{tpu_custom_call.1} parent=71 // pred_fallthru
          _
        // Predicated region
        $region89: #{tpu_custom_call.1} parent=71 // pred_check
          %p590 = pneg %p156
        $region90: #{tpu_custom_call.1} parent=71 // pred_check_branch
          %592 = sbr.rel (%p590) target = $region92
        $region91: #{tpu_custom_call.1} parent=71 // pred_region
          %594 = dma.done [#allocation9], 64
        $region92: #{tpu_custom_call.1} parent=71 // pred_fallthru
          _
        // Predicated region
        $region93: #{tpu_custom_call.1} parent=71 // pred_check
          %p595 = pneg %p177
        $region94: #{tpu_custom_call.1} parent=71 // pred_check_branch
          %597 = sbr.rel (%p595) target = $region96
        $region95: #{tpu_custom_call.1} parent=71 // pred_region
          %599 = dma.done [#allocation12], 256
        $region96: #{tpu_custom_call.1} parent=71 // pred_fallthru
          _
        // Predicated region
        $region97: #{tpu_custom_call.1} parent=71 // pred_check
          %p600 = pneg %p219
        $region98: #{tpu_custom_call.1} parent=71 // pred_check_branch
          %602 = sbr.rel (%p600) target = $region100
        $region99: #{tpu_custom_call.1} parent=71 // pred_region
          %604 = dma.done [#allocation12], 256
        $region100: #{tpu_custom_call.1} parent=71 // pred_fallthru
          _
        // Predicated region
        $region101: #{tpu_custom_call.1} parent=71 // pred_check
          %p605 = pneg %p240
        $region102: #{tpu_custom_call.1} parent=71 // pred_check_branch
          %607 = sbr.rel (%p605) target = $region104
        $region103: #{tpu_custom_call.1} parent=71 // pred_region
          %609 = dma.done [#allocation15], 64
        $region104: #{tpu_custom_call.1} parent=71 // pred_fallthru
          _
        // Predicated region
        $region105: #{tpu_custom_call.1} parent=71 // pred_check
          %p610 = pneg %p261
        $region106: #{tpu_custom_call.1} parent=71 // pred_check_branch
          %612 = sbr.rel (%p610) target = $region108
        $region107: #{tpu_custom_call.1} parent=71 // pred_region
          %614 = dma.done [#allocation15], 256
        $region108: #{tpu_custom_call.1} parent=71 // pred_fallthru
          _
        %s615 = sand.u32 %s49, 1
        %s616 = scalar_lea.sflag [#allocation3], %s615
        %s617 = sand.u32 %s49, 1
        %s618 = smul.addr %s617, 8
        %s619 = scalar_lea.vmem [#allocation2], %s618
        %p620 = pneg %p62
        %p621 = pneg %p59
        %s622 = sand.u32 %s41, 1
        %s623 = scalar_lea.sflag [#allocation6], %s622
        %s624 = sand.u32 %s75, 1
        %s625 = smul.addr %s624, 4
        %s626 = scalar_lea.vmem [#allocation5], %s625
        %p627 = pneg %p88
        %p628 = pneg %p85
        %s629 = sand.u32 %s41, 1
        %s630 = scalar_lea.sflag [#allocation6], %s629
        %s631 = sand.u32 %s101, 1
        %s632 = smul.addr %s631, 4
        %s633 = scalar_lea.vmem [#allocation7], %s632
        %p634 = pneg %p114
        %p635 = pneg %p111
        %p636 = pneg %p135
        %p637 = pneg %p132
        %p638 = pneg %p156
        %p639 = pneg %p153
        %p640 = pneg %p177
        %p641 = pneg %p174
        %p642 = pneg %p198
        %p643 = pneg %p195
        %p644 = pneg %p219
        %p645 = pneg %p216
        %p646 = pneg %p240
        %p647 = pneg %p237
        %p648 = pneg %p261
        %p649 = pneg %p258
        %p650 = pneg %p282
        %p651 = pneg %p279
        %p652 = pneg %p303
        %p653 = pneg %p300
        %p654 = pneg %p324
        %p655 = pneg %p321
        %p656 = pneg %p350
        %p657 = pneg %p347
        %s658 = sand.u32 %s337, 1
        %s659 = scalar_lea.sflag [#allocation4], %s658
        %s660 = sand.u32 %s337, 1
        %s661 = smul.addr %s660, 8
        %s662 = scalar_lea.vmem [#allocation17], %s661
        %p663 = pneg %p376
        %p664 = pneg %p373
        %s665 = sand.u32 %s363, 1
        %s666 = scalar_lea.sflag [#allocation19], %s665
        %s667 = sand.u32 %s363, 1
        %s668 = smul.addr %s667, 8
        %s669 = scalar_lea.vmem [#allocation18], %s668
        %v671 = vld [vmem:[%s559] sm:$0xff]
        %v672 = vld [vmem:[%s569] sm:$0xf]
        %v673 = vunpack.c.l.bf16 %v672
        %v674 = vadd.f32 %v671, %v673
        %v675 = vld [vmem:[%s579] sm:$0xf]
        %v676 = vunpack.c.l.bf16 %v675
        %v677 = vadd.f32 %v674, %v676
        %v678 = vpack.c.bf16 %v677, %v677
        %v679 = vpack.c.bf16 %v671, %v671
        loop: start=0, step=1, limit=4
        $region109: #{tpu_custom_call.1} parent=71 // loop_pre_header
          _
        $region110: #{tpu_custom_call.1} parent=71 // loop_header
          %s681 = sphi 0, %s685
          %p682 = scmp.ge.s32.totalorder %s681, 4
          %v686 = vphi 0.0, %v845
          %v687 = vphi 0.0, %v846
        $region111: #{tpu_custom_call.1} parent=71 // loop_header_branch
          %684 = sbr.rel (%p682) target = $region115
        $region112: #{tpu_custom_call.1} parent=71 // loop_body
          %s688 = smul.addr %s681, 4
          %s689 = scalar_lea.vmem [#allocation8], %s688
          %v690 = vld [vmem:[%s689] sm:$0xf]
          %s691 = scalar_lea.vmem [#allocation10], %s681
          %v692 = vld [vmem:[%s691] sm:$0x1]
          %v694 = vperm.slane %v692, 0
          %vm696 = vcmask 261120
          %v698 = vsel %vm696, %v678, 0
          %v701 = vsel %vm696, %v690, 0
          %703 = vmatpush.bf16.xpose.msra.mxu0 0
          %704 = vmatpush.bf16.xpose.msra.mxu0 0
          %705 = vmatpush.bf16.xpose.msra.mxu0 0
          %706 = vmatpush.bf16.xpose.msra.mxu0 0
          %707 = vmatpush.bf16.xpose.msra.mxu0 0
          %708 = vmatpush.bf16.xpose.msra.mxu0 0
          %709 = vmatpush.bf16.xpose.msra.mxu0 0
          %710 = vmatpush.bf16.xpose.msra.mxu0 %v701
          %711 = vmatmul.bf16.gmra.mxu0 %v698
          %v712 = vpop.f32.mrf.mxu0
          %v713 = vadd.f32 %v694, %v712
          %v714 = vpop.f32.mrf.mxu0
          %715 = vdwg.mxu0
          %s716 = smul.addr %s681, 4
          %s717 = scalar_lea.vmem [#allocation11], %s716
          %v718 = vld [vmem:[%s717] sm:$0xf]
          %s719 = scalar_lea.vmem %s6, %s681
          %v720 = vld [vmem:[%s719] sm:$0x1]
          %v722 = vperm.slane %v720, 0
          %v725 = vsel %vm696, %v718, 0
          %727 = vmatpush.bf16.xpose.msra.mxu0 0
          %728 = vmatpush.bf16.xpose.msra.mxu0 0
          %729 = vmatpush.bf16.xpose.msra.mxu0 0
          %730 = vmatpush.bf16.xpose.msra.mxu0 0
          %731 = vmatpush.bf16.xpose.msra.mxu0 0
          %732 = vmatpush.bf16.xpose.msra.mxu0 0
          %733 = vmatpush.bf16.xpose.msra.mxu0 0
          %734 = vmatpush.bf16.xpose.msra.mxu0 %v725
          %735 = vmatmul.bf16.gmra.mxu0 %v698
          %v736 = vpop.f32.mrf.mxu0
          %v737 = vadd.f32 %v722, %v736
          %v738 = vpop.f32.mrf.mxu0
          %739 = vdwg.mxu0
          %s740 = smul.addr %s681, 4
          %s741 = scalar_lea.vmem [#allocation13], %s740
          %v742 = vld [vmem:[%s741] sm:$0xf]
          %s743 = scalar_lea.vmem [#allocation14], %s681
          %v744 = vld [vmem:[%s743] sm:$0x1]
          %v746 = vperm.slane %v744, 0
          %v749 = vsel %vm696, %v679, 0
          %v752 = vsel %vm696, %v742, 0
          %754 = vmatpush.bf16.xpose.msra.mxu0 0
          %755 = vmatpush.bf16.xpose.msra.mxu0 0
          %756 = vmatpush.bf16.xpose.msra.mxu0 0
          %757 = vmatpush.bf16.xpose.msra.mxu0 0
          %758 = vmatpush.bf16.xpose.msra.mxu0 0
          %759 = vmatpush.bf16.xpose.msra.mxu0 0
          %760 = vmatpush.bf16.xpose.msra.mxu0 0
          %761 = vmatpush.bf16.xpose.msra.mxu0 %v752
          %762 = vmatmul.bf16.gmra.mxu0 %v749
          %v763 = vpop.f32.mrf.mxu0
          %v764 = vadd.f32 %v746, %v763
          %v765 = vpop.f32.mrf.mxu0
          %766 = vdwg.mxu0
          %v767 = vpack.c.bf16 %v713, %v713
          %v768 = vpack.c.bf16 %v737, %v737
          %vm769 = vcmask 64512
          %v771 = vsel %vm769, %v767, 0
          %v774 = vsel %vm769, %v768, 0
          %776 = vmatpush.bf16.xpose.msra.mxu0 0
          %777 = vmatpush.bf16.xpose.msra.mxu0 0
          %778 = vmatpush.bf16.xpose.msra.mxu0 0
          %779 = vmatpush.bf16.xpose.msra.mxu0 0
          %780 = vmatpush.bf16.xpose.msra.mxu0 0
          %781 = vmatpush.bf16.xpose.msra.mxu0 0
          %782 = vmatpush.bf16.xpose.msra.mxu0 0
          %783 = vmatpush.bf16.xpose.msra.mxu0 %v774
          %784 = vmatmul.bf16.gmra.mxu0 %v771
          %v785 = vpop.f32.mrf.mxu0
          %v786 = vadd.f32 0.0, %v785
          %v787 = vpop.f32.mrf.mxu0
          %788 = vdwg.mxu0
          %v789 = vsel %vm769, %v786, -inf
          %790 = vmax.xlane.f32.xlu0 %v789
          %v791 = vpop.xlane.xlu0 %790
          %v792 = vsub.f32 %v786, %v791
          %v793 = vmul.f32 %v792, 1.442695
          %v794 = vpow.pop %v793
          %v795 = vsel %vm769, %v794, 0.0
          %796 = vadd.xlane.f32.xlu0 %v795
          %v797 = vpop.xlane.xlu0 %796
          %v798 = vrcp.pop %v797
          %v799 = vmul.f32 %v794, %v798
          %v800 = vpack.c.bf16 %v799, %v799
          %v801 = vpack.c.bf16 %v764, %v764
          %v803 = vsel %vm769, %v800, 0
          %vm805 = vcmask 1043456
          %v807 = vsel %vm805, %v801, 0
          %809 = vmatpush.bf16.msra.mxu0 0
          %810 = vmatpush.bf16.msra.mxu0 0
          %811 = vmatpush.bf16.msra.mxu0 0
          %812 = vmatpush.bf16.msra.mxu0 0
          %813 = vmatpush.bf16.msra.mxu0 0
          %814 = vmatpush.bf16.msra.mxu0 0
          %815 = vmatpush.bf16.msra.mxu0 0
          %816 = vmatpush.bf16.msra.mxu0 %v807
          %817 = vmatmul.bf16.gmra.mxu0 %v803
          %v818 = vpop.f32.mrf.mxu0
          %v819 = vadd.f32 0.0, %v818
          %v820 = vpop.f32.mrf.mxu0
          %821 = vdwg.mxu0
          %v822 = vpack.c.bf16 %v819, %v819
          %s823 = smul.addr %s681, 4
          %s824 = scalar_lea.vmem [#allocation16], %s823
          %v825 = vld [vmem:[%s824] sm:$0xf]
          %v827 = vsel %vm769, %v822, 0
          %v830 = vsel %vm805, %v825, 0
          %832 = vmatpush.bf16.msra.mxu0 0
          %833 = vmatpush.bf16.msra.mxu0 0
          %834 = vmatpush.bf16.msra.mxu0 0
          %835 = vmatpush.bf16.msra.mxu0 0
          %836 = vmatpush.bf16.msra.mxu0 0
          %837 = vmatpush.bf16.msra.mxu0 0
          %838 = vmatpush.bf16.msra.mxu0 0
          %839 = vmatpush.bf16.msra.mxu0 %v830
          %840 = vmatmul.bf16.gmra.mxu0 %v827
          %v841 = vpop.f32.mrf.mxu0
          %v842 = vadd.f32 0.0, %v841
          %v843 = vpop.f32.mrf.mxu0
          %844 = vdwg.mxu0
          %v845 = vadd.f32 %v686, %v842
          %v846 = vadd.f32 %v687, %v799
        $region113: #{tpu_custom_call.1} parent=71 // loop_footer
          %s685 = sadd.s32 1, %s681
        $region114: #{tpu_custom_call.1} parent=71 // loop_footer_branch
          %680 = sbr.rel target = $region110
        $region115: #{tpu_custom_call.1} parent=71 // loop_exit
          _
        %v847 = vld [vmem:[%s10] sm:$0x1]
        %v849 = vperm.slane %v847, 0
        %v851 = vadd.f32 %v686, %v849
        %v852 = vadd.f32 %v671, %v851
        %vm853 = vcmask 261120
        %v854 = vsel %vm853, %v852, 0.0
        %855 = vadd.xlane.f32.xlu0 %v854
        %v856 = vpop.xlane.xlu0 %855
        %v857 = vrcp.pop 32.0
        %v858 = vmul.f32 32.0, %v857
        %v859 = vsub.f32 1.0, %v858
        %v860 = vmul.f32 %v857, %v859
        %v861 = vadd.f32 %v857, %v860
        %vm862 = vweird.f32 %v857
        %v863 = vsel %vm862, %v857, %v861
        %v864 = vmul.f32 %v856, %v863
        %v865 = vsub.f32 %v852, %v864
        %v866 = vmul.f32 %v865, %v865
        %v867 = vsel %vm853, %v866, 0.0
        %868 = vadd.xlane.f32.xlu0 %v867
        %v869 = vpop.xlane.xlu0 %868
        %v870 = vmul.f32 %v869, %v863
        %v871 = vadd.f32 %v870, 1e-05
        %v872 = vrsqrt.pop %v871
        %v873 = vmul.f32 %v872, %v871
        %v874 = vmul.f32 %v873, %v872
        %v875 = vmul.f32 0.5, %v874
        %v876 = vsub.f32 1.5, %v875
        %v877 = vmul.f32 %v872, %v876
        %vm878 = vweird.f32 %v871
        %vm879 = vweird.f32 %v872
        %vm880 = vmor %vm878, %vm879
        %v881 = vsel %vm880, %v872, %v877
        %v882 = vmul.f32 %v865, %v881
        %v883 = vld [vmem:[%s11] sm:$0x1]
        %v885 = vperm.slane %v883, 0
        %v887 = vmul.f32 %v882, %v885
        %v888 = vld [vmem:[%s12] sm:$0x1]
        %v890 = vperm.slane %v888, 0
        %v892 = vadd.f32 %v887, %v890
        %v893 = vmul.f32 %v687, 0.25
        %894 = vst.msk [vmem:[%s662] sm:$0xff] %vm853, %v892
        %vm895 = vcmask 64512
        %896 = vst.msk [vmem:[%s669] sm:$0xff] %vm895, %v893
        %s897 = sand.u32 %s337, 1
        %s898 = scalar_lea.sflag [#allocation4], %s897
        %s899 = sand.u32 %s337, 1
        %s900 = smul.addr %s899, 8
        %s901 = scalar_lea.vmem [#allocation17], %s900
        %s902 = sand.u32 %s363, 1
        %s903 = scalar_lea.sflag [#allocation19], %s902
        %s904 = sand.u32 %s363, 1
        %s905 = smul.addr %s904, 8
        %s906 = scalar_lea.vmem [#allocation18], %s905
        // Predicated region
        $region116: #{tpu_custom_call.1} parent=71 // pred_check
          %p907 = pneg %p347
        $region117: #{tpu_custom_call.1} parent=71 // pred_check_branch
          %909 = sbr.rel (%p907) target = $region119
        $region118: #{tpu_custom_call.1} parent=71 // pred_region
          %911 = vsyncadd %s898, 0
          %s912 = smul.addr %s41, 8
          %s913 = scalar_lea.hbm %s13, %s912
          %s915 = sshll.u32 %s901, 4
          %s916 = int_to_ptr.vmem [resolvable:$true] %s915
          %s917 = sshll.u32 %s913, 4
          %s918 = int_to_ptr.hbm [resolvable:$true] %s917
          %920 = dma.vmem_to_hbm [thread:$0]  %s916, 128, %s918, %s898
        $region119: #{tpu_custom_call.1} parent=71 // pred_fallthru
          _
        // Predicated region
        $region120: #{tpu_custom_call.1} parent=71 // pred_check
          %p921 = pneg %p373
        $region121: #{tpu_custom_call.1} parent=71 // pred_check_branch
          %923 = sbr.rel (%p921) target = $region123
        $region122: #{tpu_custom_call.1} parent=71 // pred_region
          %925 = vsyncadd %s903, 0
          %s926 = smul.addr %s41, 8
          %s927 = scalar_lea.hbm %s14, %s926
          %s929 = sshll.u32 %s906, 4
          %s930 = int_to_ptr.vmem [resolvable:$true] %s929
          %s931 = sshll.u32 %s927, 4
          %s932 = int_to_ptr.hbm [resolvable:$true] %s931
          %934 = dma.vmem_to_hbm [thread:$0]  %s930, 128, %s932, %s903
        $region123: #{tpu_custom_call.1} parent=71 // pred_fallthru
          _
      $region72: #{tpu_custom_call.1} parent=5 // pred_fallthru
        _
      %p935 = scmp.le.s32.totalorder 2, %s36
      // Predicated region
      $region124: #{tpu_custom_call.1} parent=5 // pred_check
        %p936 = pneg %p935
      $region125: #{tpu_custom_call.1} parent=5 // pred_check_branch
        %938 = sbr.rel (%p936) target = $region127
      $region126: #{tpu_custom_call.1} parent=5 // pred_region
        %s939 = ssub.s32 %s36, 2
        // Predicated region
        $region128: #{tpu_custom_call.1} parent=126 // pred_check
          %p940 = pneg %p353
        $region129: #{tpu_custom_call.1} parent=126 // pred_check_branch
          %942 = sbr.rel (%p940) target = $region131
        $region130: #{tpu_custom_call.1} parent=126 // pred_region
          %s943 = sand.u32 %s338, 1
          %s944 = scalar_lea.sflag [#allocation4], %s943
          %s945 = sand.u32 %s338, 1
          %s946 = smul.addr %s945, 8
          %s947 = scalar_lea.vmem [#allocation17], %s946
          %949 = dma.done %s944, 128
        $region131: #{tpu_custom_call.1} parent=126 // pred_fallthru
          _
        // Predicated region
        $region132: #{tpu_custom_call.1} parent=126 // pred_check
          %p950 = pneg %p379
        $region133: #{tpu_custom_call.1} parent=126 // pred_check_branch
          %952 = sbr.rel (%p950) target = $region135
        $region134: #{tpu_custom_call.1} parent=126 // pred_region
          %s953 = sand.u32 %s364, 1
          %s954 = scalar_lea.sflag [#allocation19], %s953
          %s955 = sand.u32 %s364, 1
          %s956 = smul.addr %s955, 8
          %s957 = scalar_lea.vmem [#allocation18], %s956
          %959 = dma.done %s954, 128
        $region135: #{tpu_custom_call.1} parent=126 // pred_fallthru
          _
      $region127: #{tpu_custom_call.1} parent=5 // pred_fallthru
        _
    $region6: #{tpu_custom_call.1} parent=1 // loop_footer
      %s40 = sadd.s32 1, %s36
    $region7: #{tpu_custom_call.1} parent=1 // loop_footer_branch
      %35 = sbr.rel target = $region3
    $region8: #{tpu_custom_call.1} parent=1 // loop_exit
      _
    %960 = vsyncpa [#allocation3], 1
    %s961 = scalar_lea.sflag [#allocation3], 1
    %962 = vsyncpa %s961, 1
    %963 = vsyncpa [#allocation6], 1
    %s964 = scalar_lea.sflag [#allocation6], 1
    %965 = vsyncpa %s964, 1
    %966 = vsyncpa [#allocation9], 1
    %967 = vsyncpa [#allocation12], 1
    %968 = vsyncpa [#allocation15], 1
    %969 = vsyncpa [#allocation4], 1
    %s970 = scalar_lea.sflag [#allocation4], 1
    %971 = vsyncpa %s970, 1
    %972 = vsyncpa [#allocation19], 1
    %s973 = scalar_lea.sflag [#allocation19], 1
    %974 = vsyncpa %s973, 1

</llo_original>
